<compile_context>
chip_gen: v6e
topology: v6e:2x2x1
jax: 0.10.0
libtpu: 0.0.40
codegen_flags: <defaults>
</compile_context>

<pallas_src>
import functools

import jax
import jax.numpy as jnp
from jax.experimental import pallas as pl
from jax.experimental.pallas import tpu as pltpu

LANE = 128
SUBLANE = 8


def _rup(x, m):
    return ((x + m - 1) // m) * m


# ---------------------------------------------------------------------------
# In-kernel helpers
# ---------------------------------------------------------------------------

def _mxu(a, b):
    """a[m,k] @ b[k,n] on the MXU: bf16 operands, f32 accumulation.
    (astype is a no-op when the operand is already bf16 — weights arrive bf16)."""
    return jnp.dot(a.astype(jnp.bfloat16), b.astype(jnp.bfloat16),
                   preferred_element_type=jnp.float32)


def _mxu_nt(a, b):
    """a[m,k] contracted with b[n,k] -> [m,n]; no transpose materialized."""
    return jax.lax.dot_general(
        a.astype(jnp.bfloat16), b.astype(jnp.bfloat16),
        dimension_numbers=(((1,), (1,)), ((), ())),
        preferred_element_type=jnp.float32)


def _layernorm(x, g, b):
    mean = jnp.mean(x, axis=-1, keepdims=True)
    var = jnp.mean(jnp.square(x - mean), axis=-1, keepdims=True)
    return (x - mean) * jax.lax.rsqrt(var + 1e-5) * g + b


# ---------------------------------------------------------------------------
# Single fused ViT forward kernel
# ---------------------------------------------------------------------------

def _vit_fused_kernel(
    patches_ref,                       # [B*S_pad, patch_dim] bf16 (rows pre-placed)
    w_emb_ref, w_qkv_ref, w_o_ref, w1_ref, w2_ref, w_head_ref,   # bf16 weights
    pos_ref,                           # [B*S_pad, D] f32 (cls + pos + embed-bias rows)
    vecd_ref,                          # [8, D] f32 packed LN/bias vectors
    vecw_ref,                          # [8, 3*heads*LANE] f32 packed wide biases
    o_ref,                             # [B_out, nc_pad] f32 lane/sublane-dense logits
    *, B, S, S_pad, heads):
    D = w_emb_ref.shape[1]
    mlp_dim = w1_ref.shape[1]
    Dh = D // heads
    B_out = o_ref.shape[0]

    # Packed per-row vectors (two DMAs instead of 13 tiny ones).
    ln1_g, ln1_b = vecd_ref[0:1, :], vecd_ref[1:2, :]
    b_o = vecd_ref[2:3, :]
    ln2_g, ln2_b = vecd_ref[3:4, :], vecd_ref[4:5, :]
    b2 = vecd_ref[5:6, :]
    lnf_g, lnf_b = vecd_ref[6:7, :], vecd_ref[7:8, :]
    b_qkv = vecw_ref[0:1, :]
    b1 = vecw_ref[1:2, :mlp_dim]
    b_head = vecw_ref[2:3, :o_ref.shape[1]]

    # ---- patch embedding: rows (cls / patches / padding) are already placed
    #      by the wrapper, so the residual stream is one matmul + one add.
    z = _mxu(patches_ref[...], w_emb_ref[...]) + pos_ref[...]       # [B*S_pad, D] f32

    # ---- encoder block: pre-LN multi-head self-attention ---------------------
    h1 = _layernorm(z, ln1_g, ln1_b)
    # QKV columns are padded so each head's Q/K/V block starts on a 128-lane
    # boundary; 1/sqrt(Dh) is folded into the Q columns. Cast to bf16 once.
    qkv = (_mxu(h1, w_qkv_ref[...]) + b_qkv).astype(jnp.bfloat16)   # [B*S_pad, 3*heads*LANE]
    kmask = jax.lax.broadcasted_iota(jnp.int32, (S_pad, S_pad), 1) < S

    # TODO(synk): B*heads = 4 at toy sizes -> static unrolled loops; at
    # production ViT sizes this becomes a ("parallel", ...) grid over tiles.
    per_batch = []
    for b in range(B):
        qb = qkv[b * S_pad:(b + 1) * S_pad, :]                      # sublane-aligned slice
        head_out = []
        for h in range(heads):
            col = (h * 3) * LANE                                    # lane-aligned starts
            q = qb[:, col:col + Dh]
            k = qb[:, col + LANE:col + LANE + Dh]
            v = qb[:, col + 2 * LANE:col + 2 * LANE + Dh]
            s = _mxu_nt(q, k)                                       # [S_pad, S_pad]
            s = jnp.where(kmask, s, -1e30)                          # mask padded key rows
            s = s - jnp.max(s, axis=-1, keepdims=True)
            p = jnp.exp(s)
            p = p * pl.reciprocal(jnp.sum(p, axis=-1, keepdims=True), approx=True)
            head_out.append(_mxu(p, v))                             # [S_pad, Dh]
        per_batch.append(jnp.concatenate(head_out, axis=-1))        # [S_pad, D]
    attn = jnp.concatenate(per_batch, axis=0)                       # [B*S_pad, D]
    # Single W_o matmul for all batches/heads; single b_o broadcast.
    z = z + _mxu(attn, w_o_ref[...]) + b_o

    # ---- MLP with residual ----------------------------------------------------
    h2 = _layernorm(z, ln2_g, ln2_b)
    m = _mxu(h2, w1_ref[...]) + b1
    # TODO(synk): tanh-approx GELU (EUP-friendly); PyTorch nn.GELU default is erf.
    m = jax.nn.gelu(m, approximate=True)
    z = z + _mxu(m, w2_ref[...]) + b2

    # ---- final LN + classification head on cls rows only (batched) -----------
    cls_rows = [z[b * S_pad:b * S_pad + 1, :] for b in range(B)]
    if B_out > B:
        cls_rows.append(jnp.zeros((B_out - B, D), jnp.float32))
    cls = jnp.concatenate(cls_rows, axis=0)                         # [B_out, D]
    cls = _layernorm(cls, lnf_g, lnf_b)
    # One [B_out, D] @ [D, nc_pad] matmul, one unmasked lane-dense store.
    o_ref[...] = _mxu(cls, w_head_ref[...]) + b_head


# ---------------------------------------------------------------------------
# Parameter init (deterministic) + forward glue
# ---------------------------------------------------------------------------

def init_vit_params(key, *, num_channels, num_classes, img_size, patch_size,
                    dim, heads, mlp_dim):
    P = patch_size
    n_patches = (img_size // P) ** 2
    patch_dim = num_channels * P * P
    ks = jax.random.split(key, 10)

    def w(k, shape, fan_in):
        return jax.random.normal(k, shape, jnp.float32) / jnp.sqrt(fan_in)

    return dict(
        w_embed=w(ks[0], (patch_dim, dim), patch_dim),
        b_embed=jnp.zeros((dim,), jnp.float32),
        cls_token=w(ks[1], (1, dim), dim),
        pos_emb=w(ks[2], (n_patches + 1, dim), dim),
        ln1_g=jnp.ones((dim,), jnp.float32), ln1_b=jnp.zeros((dim,), jnp.float32),
        w_qkv=w(ks[3], (dim, 3 * dim), dim),
        b_qkv=jnp.zeros((3 * dim,), jnp.float32),
        wo=w(ks[4], (dim, dim), dim), bo=jnp.zeros((dim,), jnp.float32),
        ln2_g=jnp.ones((dim,), jnp.float32), ln2_b=jnp.zeros((dim,), jnp.float32),
        w1=w(ks[5], (dim, mlp_dim), dim), b1=jnp.zeros((mlp_dim,), jnp.float32),
        w2=w(ks[6], (mlp_dim, dim), mlp_dim), b2=jnp.zeros((dim,), jnp.float32),
        lnf_g=jnp.ones((dim,), jnp.float32), lnf_b=jnp.zeros((dim,), jnp.float32),
        w_head=w(ks[7], (dim, num_classes), dim),
        b_head=jnp.zeros((num_classes,), jnp.float32),
    )


def vit_forward(params, x, *, patch_size, heads):
    B, C, H, W = x.shape
    P = patch_size
    nh, nw = H // P, W // P
    N = nh * nw
    S = N + 1
    S_pad = _rup(S, SUBLANE)
    D = params["w_embed"].shape[1]
    Dh = D // heads
    mlp_dim = params["w1"].shape[1]
    num_classes = params["w_head"].shape[1]
    patch_dim = C * P * P
    nc_pad = _rup(max(num_classes, LANE), LANE)
    B_out = _rup(B, SUBLANE)
    qkv_w = 3 * heads * LANE

    f32, bf16 = jnp.float32, jnp.bfloat16

    # Patchify NCHW -> [B, N, C*P*P] (channel-major flatten, matching Conv2d),
    # then pre-place rows at [b, 1+i] so the kernel never does masked
    # sub-tile row assembly (cls slot and pad rows stay zero).
    p3 = (x.reshape(B, C, nh, P, nw, P)
            .transpose(0, 2, 4, 1, 3, 5)
            .reshape(B, N, patch_dim))
    patches_padded = (jnp.zeros((B, S_pad, patch_dim), f32)
                      .at[:, 1:1 + N, :].set(p3)
                      .reshape(B * S_pad, patch_dim)
                      .astype(bf16))

    # Row-placed cls / positional / patch-embed-bias block, tiled over batch.
    pos_block = jnp.zeros((S_pad, D), f32)
    pos_block = pos_block.at[0:1, :].set(params["cls_token"] + params["pos_emb"][0:1, :])
    pos_block = pos_block.at[1:S, :].set(params["pos_emb"][1:S, :] + params["b_embed"][None, :])
    pos_full = jnp.tile(pos_block, (B, 1))                           # [B*S_pad, D]

    # QKV weights reordered/padded so each head's Q/K/V block starts on a
    # 128-lane boundary; attention scale folded into the Q columns/bias.
    scale = Dh ** -0.5
    w_qkv_pad = jnp.zeros((D, qkv_w), f32)
    b_qkv_pad = jnp.zeros((qkv_w,), f32)
    for h in range(heads):
        for j in range(3):                                           # 0=Q, 1=K, 2=V
            src_w = params["w_qkv"][:, j * D + h * Dh: j * D + (h + 1) * Dh]
            src_b = params["b_qkv"][j * D + h * Dh: j * D + (h + 1) * Dh]
            if j == 0:
                src_w = src_w * scale
                src_b = src_b * scale
            col = (h * 3 + j) * LANE
            w_qkv_pad = w_qkv_pad.at[:, col:col + Dh].set(src_w)
            b_qkv_pad = b_qkv_pad.at[col:col + Dh].set(src_b)

    # Lane-dense classification head (pad num_classes up to 128 lanes).
    w_head_pad = jnp.zeros((D, nc_pad), f32).at[:, :num_classes].set(params["w_head"])
    b_head_pad = jnp.zeros((nc_pad,), f32).at[:num_classes].set(params["b_head"])

    # Pack the remaining per-row vectors into two VMEM tiles (2 DMAs, not 13).
    vec_d = jnp.stack([
        params["ln1_g"], params["ln1_b"], params["bo"],
        params["ln2_g"], params["ln2_b"], params["b2"],
        params["lnf_g"], params["lnf_b"],
    ], axis=0)                                                       # [8, D]
    vec_wide = jnp.zeros((SUBLANE, qkv_w), f32)
    vec_wide = vec_wide.at[0, :].set(b_qkv_pad)
    vec_wide = vec_wide.at[1, :mlp_dim].set(params["b1"])
    vec_wide = vec_wide.at[2, :nc_pad].set(b_head_pad)

    kernel = functools.partial(_vit_fused_kernel, B=B, S=S, S_pad=S_pad, heads=heads)
    vmem = pl.BlockSpec(memory_space=pltpu.MemorySpace.VMEM)

    # TODO(synk): at production ViT sizes, switch to a token/batch grid with
    # dimension_semantics=("parallel", ...) and pipelined BlockSpecs (weights
    # resident via constant index_map) so v7x's 2 TensorCores and 64 MiB VMEM
    # are used; at these toy shapes a single fused program is fastest.
    logits_pad = pl.pallas_call(
        kernel,
        out_shape=jax.ShapeDtypeStruct((B_out, nc_pad), jnp.float32),
        in_specs=[vmem] * 10,
        out_specs=vmem,
    )(
        patches_padded,
        params["w_embed"].astype(bf16),
        w_qkv_pad.astype(bf16),
        params["wo"].astype(bf16),
        params["w1"].astype(bf16),
        params["w2"].astype(bf16),
        w_head_pad.astype(bf16),
        pos_full,
        vec_d,
        vec_wide,
    )
    return logits_pad[:B, :num_classes]                              # [B, num_classes]


# ---------------------------------------------------------------------------

if __name__ == "__main__":
    NUM_CHANNELS = 4
    NUM_CLASSES = 10
    IMG_SIZE = 16
    PATCH_SIZE = 8
    DIM = 32
    HEADS = 2
    MLP_DIM = 64
    B = 2

    key = jax.random.PRNGKey(0)
    k_param, k_input = jax.random.split(key)

    params = init_vit_params(
        k_param,
        num_channels=NUM_CHANNELS,
        num_classes=NUM_CLASSES,
        img_size=IMG_SIZE,
        patch_size=PATCH_SIZE,
        dim=DIM,
        heads=HEADS,
        mlp_dim=MLP_DIM,
    )

    x = jax.random.normal(k_input, (B, NUM_CHANNELS, IMG_SIZE, IMG_SIZE), jnp.float32)

    fwd = jax.jit(functools.partial(vit_forward, patch_size=PATCH_SIZE, heads=HEADS))
    logits = fwd(params, x)
    jax.block_until_ready(logits)

    assert logits.shape == (B, NUM_CLASSES)
    assert bool(jnp.all(jnp.isfinite(logits)))
    print("KERNEL_OK")
</pallas_src>

<mosaic_0001>
module attributes {stable_mosaic.version = 11 : i64} {
  func.func @_vit_fused_kernel(%arg0: memref<16x256xbf16, #tpu.memory_space<vmem>>, %arg1: memref<256x32xbf16, #tpu.memory_space<vmem>>, %arg2: memref<32x768xbf16, #tpu.memory_space<vmem>>, %arg3: memref<32x32xbf16, #tpu.memory_space<vmem>>, %arg4: memref<32x64xbf16, #tpu.memory_space<vmem>>, %arg5: memref<64x32xbf16, #tpu.memory_space<vmem>>, %arg6: memref<32x128xbf16, #tpu.memory_space<vmem>>, %arg7: memref<16x32xf32, #tpu.memory_space<vmem>>, %arg8: memref<8x32xf32, #tpu.memory_space<vmem>>, %arg9: memref<8x768xf32, #tpu.memory_space<vmem>>, %arg10: memref<8x128xf32, #tpu.memory_space<vmem>>) attributes {dimension_semantics = [], scalar_prefetch = 0 : i64, scratch_operands = 0 : i64, tpu.core_type = #tpu.core_type<tc>} {
    %c0 = arith.constant 0 : index
    %c0_0 = arith.constant 0 : index
    %0 = vector.load %arg8[%c0, %c0_0] : memref<8x32xf32, #tpu.memory_space<vmem>>, vector<1x32xf32>
    %c1 = arith.constant 1 : index
    %c0_1 = arith.constant 0 : index
    %1 = vector.load %arg8[%c1, %c0_1] : memref<8x32xf32, #tpu.memory_space<vmem>>, vector<1x32xf32>
    %c2 = arith.constant 2 : index
    %c0_2 = arith.constant 0 : index
    %2 = vector.load %arg8[%c2, %c0_2] : memref<8x32xf32, #tpu.memory_space<vmem>>, vector<1x32xf32>
    %c3 = arith.constant 3 : index
    %c0_3 = arith.constant 0 : index
    %3 = vector.load %arg8[%c3, %c0_3] : memref<8x32xf32, #tpu.memory_space<vmem>>, vector<1x32xf32>
    %c4 = arith.constant 4 : index
    %c0_4 = arith.constant 0 : index
    %4 = vector.load %arg8[%c4, %c0_4] : memref<8x32xf32, #tpu.memory_space<vmem>>, vector<1x32xf32>
    %c5 = arith.constant 5 : index
    %c0_5 = arith.constant 0 : index
    %5 = vector.load %arg8[%c5, %c0_5] : memref<8x32xf32, #tpu.memory_space<vmem>>, vector<1x32xf32>
    %c6 = arith.constant 6 : index
    %c0_6 = arith.constant 0 : index
    %6 = vector.load %arg8[%c6, %c0_6] : memref<8x32xf32, #tpu.memory_space<vmem>>, vector<1x32xf32>
    %c7 = arith.constant 7 : index
    %c0_7 = arith.constant 0 : index
    %7 = vector.load %arg8[%c7, %c0_7] : memref<8x32xf32, #tpu.memory_space<vmem>>, vector<1x32xf32>
    %c0_8 = arith.constant 0 : index
    %c0_9 = arith.constant 0 : index
    %8 = vector.load %arg9[%c0_8, %c0_9] : memref<8x768xf32, #tpu.memory_space<vmem>>, vector<1x768xf32>
    %c1_10 = arith.constant 1 : index
    %c0_11 = arith.constant 0 : index
    %9 = vector.load %arg9[%c1_10, %c0_11] : memref<8x768xf32, #tpu.memory_space<vmem>>, vector<1x64xf32>
    %c2_12 = arith.constant 2 : index
    %c0_13 = arith.constant 0 : index
    %10 = vector.load %arg9[%c2_12, %c0_13] : memref<8x768xf32, #tpu.memory_space<vmem>>, vector<1x128xf32>
    %c0_14 = arith.constant 0 : index
    %c0_15 = arith.constant 0 : index
    %11 = vector.load %arg0[%c0_14, %c0_15] : memref<16x256xbf16, #tpu.memory_space<vmem>>, vector<16x256xbf16>
    %c0_16 = arith.constant 0 : index
    %c0_17 = arith.constant 0 : index
    %12 = vector.load %arg1[%c0_16, %c0_17] : memref<256x32xbf16, #tpu.memory_space<vmem>>, vector<256x32xbf16>
    %cst = arith.constant dense<0.000000e+00> : vector<16x32xf32>
    %13 = tpu.matmul %11, %12, %cst {dimension_numbers = #tpu.dot_dimension_numbers<[1], [0], [0], [1], [0, 0, 1, 1], [], []>} : vector<16x256xbf16>, vector<256x32xbf16>, vector<16x32xf32> -> vector<16x32xf32>
    %c0_18 = arith.constant 0 : index
    %c0_19 = arith.constant 0 : index
    %14 = vector.load %arg7[%c0_18, %c0_19] : memref<16x32xf32, #tpu.memory_space<vmem>>, vector<16x32xf32>
    %15 = arith.addf %13, %14 : vector<16x32xf32>
    %cst_20 = arith.constant dense<0.000000e+00> : vector<16xf32>
    %16 = vector.multi_reduction <add>, %15, %cst_20 [1] : vector<16x32xf32> to vector<16xf32>
    %17 = vector.shape_cast %16 : vector<16xf32> to vector<16x1xf32>
    %cst_21 = arith.constant 3.200000e+01 : f32
    %18 = vector.broadcast %cst_21 : f32 to vector<16x1xf32>
    %19 = arith.divf %17, %18 : vector<16x1xf32>
    %20 = vector.broadcast %19 : vector<16x1xf32> to vector<16x32xf32>
    %21 = arith.subf %15, %20 : vector<16x32xf32>
    %22 = arith.mulf %21, %21 : vector<16x32xf32>
    %cst_22 = arith.constant dense<0.000000e+00> : vector<16xf32>
    %23 = vector.multi_reduction <add>, %22, %cst_22 [1] : vector<16x32xf32> to vector<16xf32>
    %24 = vector.shape_cast %23 : vector<16xf32> to vector<16x1xf32>
    %cst_23 = arith.constant 3.200000e+01 : f32
    %25 = vector.broadcast %cst_23 : f32 to vector<16x1xf32>
    %26 = arith.divf %24, %25 : vector<16x1xf32>
    %27 = vector.broadcast %19 : vector<16x1xf32> to vector<16x32xf32>
    %28 = arith.subf %15, %27 : vector<16x32xf32>
    %cst_24 = arith.constant 9.99999974E-6 : f32
    %29 = vector.broadcast %cst_24 : f32 to vector<16x1xf32>
    %30 = arith.addf %26, %29 : vector<16x1xf32>
    %31 = math.rsqrt %30 : vector<16x1xf32>
    %32 = vector.broadcast %31 : vector<16x1xf32> to vector<16x32xf32>
    %33 = arith.mulf %28, %32 : vector<16x32xf32>
    %34 = vector.broadcast %0 : vector<1x32xf32> to vector<16x32xf32>
    %35 = arith.mulf %33, %34 : vector<16x32xf32>
    %36 = vector.broadcast %1 : vector<1x32xf32> to vector<16x32xf32>
    %37 = arith.addf %35, %36 : vector<16x32xf32>
    %c0_25 = arith.constant 0 : index
    %c0_26 = arith.constant 0 : index
    %38 = vector.load %arg2[%c0_25, %c0_26] : memref<32x768xbf16, #tpu.memory_space<vmem>>, vector<32x768xbf16>
    %39 = arith.truncf %37 : vector<16x32xf32> to vector<16x32xbf16>
    %cst_27 = arith.constant dense<0.000000e+00> : vector<16x768xf32>
    %40 = tpu.matmul %39, %38, %cst_27 {dimension_numbers = #tpu.dot_dimension_numbers<[1], [0], [0], [1], [0, 0, 1, 1], [], []>} : vector<16x32xbf16>, vector<32x768xbf16>, vector<16x768xf32> -> vector<16x768xf32>
    %41 = vector.broadcast %8 : vector<1x768xf32> to vector<16x768xf32>
    %42 = arith.addf %40, %41 : vector<16x768xf32>
    %43 = arith.truncf %42 : vector<16x768xf32> to vector<16x768xbf16>
    %44 = tpu.iota {dimensions = array<i32: 1>} : vector<8x8xi32>
    %c5_i32 = arith.constant 5 : i32
    %45 = vector.broadcast %c5_i32 : i32 to vector<8x8xi32>
    %46 = arith.cmpi slt, %44, %45 : vector<8x8xi32>
    %47 = vector.extract_strided_slice %43 {offsets = [0, 0], sizes = [8, 768], strides = [1, 1]} : vector<16x768xbf16> to vector<8x768xbf16>
    %48 = vector.extract_strided_slice %47 {offsets = [0, 0], sizes = [8, 16], strides = [1, 1]} : vector<8x768xbf16> to vector<8x16xbf16>
    %49 = vector.extract_strided_slice %47 {offsets = [0, 128], sizes = [8, 16], strides = [1, 1]} : vector<8x768xbf16> to vector<8x16xbf16>
    %50 = vector.extract_strided_slice %47 {offsets = [0, 256], sizes = [8, 16], strides = [1, 1]} : vector<8x768xbf16> to vector<8x16xbf16>
    %cst_28 = arith.constant dense<0.000000e+00> : vector<8x8xf32>
    %51 = tpu.matmul %48, %49, %cst_28 {dimension_numbers = #tpu.dot_dimension_numbers<[1], [1], [0], [0], [0, 0, 1, 0], [], []>} : vector<8x16xbf16>, vector<8x16xbf16>, vector<8x8xf32> -> vector<8x8xf32>
    %cst_29 = arith.constant -1.000000e+30 : f32
    %52 = vector.broadcast %cst_29 : f32 to vector<8x8xf32>
    %53 = arith.select %46, %51, %52 : vector<8x8xi1>, vector<8x8xf32>
    %cst_30 = arith.constant dense<0xFF800000> : vector<8xf32>
    %54 = vector.multi_reduction <maximumf>, %53, %cst_30 [1] : vector<8x8xf32> to vector<8xf32>
    %55 = vector.shape_cast %54 : vector<8xf32> to vector<8x1xf32>
    %56 = vector.broadcast %55 : vector<8x1xf32> to vector<8x8xf32>
    %57 = arith.subf %53, %56 : vector<8x8xf32>
    %58 = math.exp %57 : vector<8x8xf32>
    %cst_31 = arith.constant dense<0.000000e+00> : vector<8xf32>
    %59 = vector.multi_reduction <add>, %58, %cst_31 [1] : vector<8x8xf32> to vector<8xf32>
    %60 = vector.shape_cast %59 : vector<8xf32> to vector<8x1xf32>
    %61 = tpu.reciprocal %60 {approx = true} : vector<8x1xf32> -> vector<8x1xf32>
    %62 = vector.broadcast %61 : vector<8x1xf32> to vector<8x8xf32>
    %63 = arith.mulf %58, %62 : vector<8x8xf32>
    %64 = arith.truncf %63 : vector<8x8xf32> to vector<8x8xbf16>
    %cst_32 = arith.constant dense<0.000000e+00> : vector<8x16xf32>
    %65 = tpu.matmul %64, %50, %cst_32 {dimension_numbers = #tpu.dot_dimension_numbers<[1], [0], [0], [1], [0, 0, 1, 1], [], []>} : vector<8x8xbf16>, vector<8x16xbf16>, vector<8x16xf32> -> vector<8x16xf32>
    %66 = vector.extract_strided_slice %47 {offsets = [0, 384], sizes = [8, 16], strides = [1, 1]} : vector<8x768xbf16> to vector<8x16xbf16>
    %67 = vector.extract_strided_slice %47 {offsets = [0, 512], sizes = [8, 16], strides = [1, 1]} : vector<8x768xbf16> to vector<8x16xbf16>
    %68 = vector.extract_strided_slice %47 {offsets = [0, 640], sizes = [8, 16], strides = [1, 1]} : vector<8x768xbf16> to vector<8x16xbf16>
    %cst_33 = arith.constant dense<0.000000e+00> : vector<8x8xf32>
    %69 = tpu.matmul %66, %67, %cst_33 {dimension_numbers = #tpu.dot_dimension_numbers<[1], [1], [0], [0], [0, 0, 1, 0], [], []>} : vector<8x16xbf16>, vector<8x16xbf16>, vector<8x8xf32> -> vector<8x8xf32>
    %cst_34 = arith.constant -1.000000e+30 : f32
    %70 = vector.broadcast %cst_34 : f32 to vector<8x8xf32>
    %71 = arith.select %46, %69, %70 : vector<8x8xi1>, vector<8x8xf32>
    %cst_35 = arith.constant dense<0xFF800000> : vector<8xf32>
    %72 = vector.multi_reduction <maximumf>, %71, %cst_35 [1] : vector<8x8xf32> to vector<8xf32>
    %73 = vector.shape_cast %72 : vector<8xf32> to vector<8x1xf32>
    %74 = vector.broadcast %73 : vector<8x1xf32> to vector<8x8xf32>
    %75 = arith.subf %71, %74 : vector<8x8xf32>
    %76 = math.exp %75 : vector<8x8xf32>
    %cst_36 = arith.constant dense<0.000000e+00> : vector<8xf32>
    %77 = vector.multi_reduction <add>, %76, %cst_36 [1] : vector<8x8xf32> to vector<8xf32>
    %78 = vector.shape_cast %77 : vector<8xf32> to vector<8x1xf32>
    %79 = tpu.reciprocal %78 {approx = true} : vector<8x1xf32> -> vector<8x1xf32>
    %80 = vector.broadcast %79 : vector<8x1xf32> to vector<8x8xf32>
    %81 = arith.mulf %76, %80 : vector<8x8xf32>
    %82 = arith.truncf %81 : vector<8x8xf32> to vector<8x8xbf16>
    %cst_37 = arith.constant dense<0.000000e+00> : vector<8x16xf32>
    %83 = tpu.matmul %82, %68, %cst_37 {dimension_numbers = #tpu.dot_dimension_numbers<[1], [0], [0], [1], [0, 0, 1, 1], [], []>} : vector<8x8xbf16>, vector<8x16xbf16>, vector<8x16xf32> -> vector<8x16xf32>
    %84 = tpu.concatenate %65, %83 in 1 : vector<8x16xf32>, vector<8x16xf32> -> vector<8x32xf32>
    %85 = vector.extract_strided_slice %43 {offsets = [8, 0], sizes = [8, 768], strides = [1, 1]} : vector<16x768xbf16> to vector<8x768xbf16>
    %86 = vector.extract_strided_slice %85 {offsets = [0, 0], sizes = [8, 16], strides = [1, 1]} : vector<8x768xbf16> to vector<8x16xbf16>
    %87 = vector.extract_strided_slice %85 {offsets = [0, 128], sizes = [8, 16], strides = [1, 1]} : vector<8x768xbf16> to vector<8x16xbf16>
    %88 = vector.extract_strided_slice %85 {offsets = [0, 256], sizes = [8, 16], strides = [1, 1]} : vector<8x768xbf16> to vector<8x16xbf16>
    %cst_38 = arith.constant dense<0.000000e+00> : vector<8x8xf32>
    %89 = tpu.matmul %86, %87, %cst_38 {dimension_numbers = #tpu.dot_dimension_numbers<[1], [1], [0], [0], [0, 0, 1, 0], [], []>} : vector<8x16xbf16>, vector<8x16xbf16>, vector<8x8xf32> -> vector<8x8xf32>
    %cst_39 = arith.constant -1.000000e+30 : f32
    %90 = vector.broadcast %cst_39 : f32 to vector<8x8xf32>
    %91 = arith.select %46, %89, %90 : vector<8x8xi1>, vector<8x8xf32>
    %cst_40 = arith.constant dense<0xFF800000> : vector<8xf32>
    %92 = vector.multi_reduction <maximumf>, %91, %cst_40 [1] : vector<8x8xf32> to vector<8xf32>
    %93 = vector.shape_cast %92 : vector<8xf32> to vector<8x1xf32>
    %94 = vector.broadcast %93 : vector<8x1xf32> to vector<8x8xf32>
    %95 = arith.subf %91, %94 : vector<8x8xf32>
    %96 = math.exp %95 : vector<8x8xf32>
    %cst_41 = arith.constant dense<0.000000e+00> : vector<8xf32>
    %97 = vector.multi_reduction <add>, %96, %cst_41 [1] : vector<8x8xf32> to vector<8xf32>
    %98 = vector.shape_cast %97 : vector<8xf32> to vector<8x1xf32>
    %99 = tpu.reciprocal %98 {approx = true} : vector<8x1xf32> -> vector<8x1xf32>
    %100 = vector.broadcast %99 : vector<8x1xf32> to vector<8x8xf32>
    %101 = arith.mulf %96, %100 : vector<8x8xf32>
    %102 = arith.truncf %101 : vector<8x8xf32> to vector<8x8xbf16>
    %cst_42 = arith.constant dense<0.000000e+00> : vector<8x16xf32>
    %103 = tpu.matmul %102, %88, %cst_42 {dimension_numbers = #tpu.dot_dimension_numbers<[1], [0], [0], [1], [0, 0, 1, 1], [], []>} : vector<8x8xbf16>, vector<8x16xbf16>, vector<8x16xf32> -> vector<8x16xf32>
    %104 = vector.extract_strided_slice %85 {offsets = [0, 384], sizes = [8, 16], strides = [1, 1]} : vector<8x768xbf16> to vector<8x16xbf16>
    %105 = vector.extract_strided_slice %85 {offsets = [0, 512], sizes = [8, 16], strides = [1, 1]} : vector<8x768xbf16> to vector<8x16xbf16>
    %106 = vector.extract_strided_slice %85 {offsets = [0, 640], sizes = [8, 16], strides = [1, 1]} : vector<8x768xbf16> to vector<8x16xbf16>
    %cst_43 = arith.constant dense<0.000000e+00> : vector<8x8xf32>
    %107 = tpu.matmul %104, %105, %cst_43 {dimension_numbers = #tpu.dot_dimension_numbers<[1], [1], [0], [0], [0, 0, 1, 0], [], []>} : vector<8x16xbf16>, vector<8x16xbf16>, vector<8x8xf32> -> vector<8x8xf32>
    %cst_44 = arith.constant -1.000000e+30 : f32
    %108 = vector.broadcast %cst_44 : f32 to vector<8x8xf32>
    %109 = arith.select %46, %107, %108 : vector<8x8xi1>, vector<8x8xf32>
    %cst_45 = arith.constant dense<0xFF800000> : vector<8xf32>
    %110 = vector.multi_reduction <maximumf>, %109, %cst_45 [1] : vector<8x8xf32> to vector<8xf32>
    %111 = vector.shape_cast %110 : vector<8xf32> to vector<8x1xf32>
    %112 = vector.broadcast %111 : vector<8x1xf32> to vector<8x8xf32>
    %113 = arith.subf %109, %112 : vector<8x8xf32>
    %114 = math.exp %113 : vector<8x8xf32>
    %cst_46 = arith.constant dense<0.000000e+00> : vector<8xf32>
    %115 = vector.multi_reduction <add>, %114, %cst_46 [1] : vector<8x8xf32> to vector<8xf32>
    %116 = vector.shape_cast %115 : vector<8xf32> to vector<8x1xf32>
    %117 = tpu.reciprocal %116 {approx = true} : vector<8x1xf32> -> vector<8x1xf32>
    %118 = vector.broadcast %117 : vector<8x1xf32> to vector<8x8xf32>
    %119 = arith.mulf %114, %118 : vector<8x8xf32>
    %120 = arith.truncf %119 : vector<8x8xf32> to vector<8x8xbf16>
    %cst_47 = arith.constant dense<0.000000e+00> : vector<8x16xf32>
    %121 = tpu.matmul %120, %106, %cst_47 {dimension_numbers = #tpu.dot_dimension_numbers<[1], [0], [0], [1], [0, 0, 1, 1], [], []>} : vector<8x8xbf16>, vector<8x16xbf16>, vector<8x16xf32> -> vector<8x16xf32>
    %122 = tpu.concatenate %103, %121 in 1 : vector<8x16xf32>, vector<8x16xf32> -> vector<8x32xf32>
    %123 = tpu.concatenate %84, %122 in 0 : vector<8x32xf32>, vector<8x32xf32> -> vector<16x32xf32>
    %c0_48 = arith.constant 0 : index
    %c0_49 = arith.constant 0 : index
    %124 = vector.load %arg3[%c0_48, %c0_49] : memref<32x32xbf16, #tpu.memory_space<vmem>>, vector<32x32xbf16>
    %125 = arith.truncf %123 : vector<16x32xf32> to vector<16x32xbf16>
    %cst_50 = arith.constant dense<0.000000e+00> : vector<16x32xf32>
    %126 = tpu.matmul %125, %124, %cst_50 {dimension_numbers = #tpu.dot_dimension_numbers<[1], [0], [0], [1], [0, 0, 1, 1], [], []>} : vector<16x32xbf16>, vector<32x32xbf16>, vector<16x32xf32> -> vector<16x32xf32>
    %127 = arith.addf %15, %126 : vector<16x32xf32>
    %128 = vector.broadcast %2 : vector<1x32xf32> to vector<16x32xf32>
    %129 = arith.addf %127, %128 : vector<16x32xf32>
    %cst_51 = arith.constant dense<0.000000e+00> : vector<16xf32>
    %130 = vector.multi_reduction <add>, %129, %cst_51 [1] : vector<16x32xf32> to vector<16xf32>
    %131 = vector.shape_cast %130 : vector<16xf32> to vector<16x1xf32>
    %cst_52 = arith.constant 3.200000e+01 : f32
    %132 = vector.broadcast %cst_52 : f32 to vector<16x1xf32>
    %133 = arith.divf %131, %132 : vector<16x1xf32>
    %134 = vector.broadcast %133 : vector<16x1xf32> to vector<16x32xf32>
    %135 = arith.subf %129, %134 : vector<16x32xf32>
    %136 = arith.mulf %135, %135 : vector<16x32xf32>
    %cst_53 = arith.constant dense<0.000000e+00> : vector<16xf32>
    %137 = vector.multi_reduction <add>, %136, %cst_53 [1] : vector<16x32xf32> to vector<16xf32>
    %138 = vector.shape_cast %137 : vector<16xf32> to vector<16x1xf32>
    %cst_54 = arith.constant 3.200000e+01 : f32
    %139 = vector.broadcast %cst_54 : f32 to vector<16x1xf32>
    %140 = arith.divf %138, %139 : vector<16x1xf32>
    %141 = vector.broadcast %133 : vector<16x1xf32> to vector<16x32xf32>
    %142 = arith.subf %129, %141 : vector<16x32xf32>
    %cst_55 = arith.constant 9.99999974E-6 : f32
    %143 = vector.broadcast %cst_55 : f32 to vector<16x1xf32>
    %144 = arith.addf %140, %143 : vector<16x1xf32>
    %145 = math.rsqrt %144 : vector<16x1xf32>
    %146 = vector.broadcast %145 : vector<16x1xf32> to vector<16x32xf32>
    %147 = arith.mulf %142, %146 : vector<16x32xf32>
    %148 = vector.broadcast %3 : vector<1x32xf32> to vector<16x32xf32>
    %149 = arith.mulf %147, %148 : vector<16x32xf32>
    %150 = vector.broadcast %4 : vector<1x32xf32> to vector<16x32xf32>
    %151 = arith.addf %149, %150 : vector<16x32xf32>
    %c0_56 = arith.constant 0 : index
    %c0_57 = arith.constant 0 : index
    %152 = vector.load %arg4[%c0_56, %c0_57] : memref<32x64xbf16, #tpu.memory_space<vmem>>, vector<32x64xbf16>
    %153 = arith.truncf %151 : vector<16x32xf32> to vector<16x32xbf16>
    %cst_58 = arith.constant dense<0.000000e+00> : vector<16x64xf32>
    %154 = tpu.matmul %153, %152, %cst_58 {dimension_numbers = #tpu.dot_dimension_numbers<[1], [0], [0], [1], [0, 0, 1, 1], [], []>} : vector<16x32xbf16>, vector<32x64xbf16>, vector<16x64xf32> -> vector<16x64xf32>
    %155 = vector.broadcast %9 : vector<1x64xf32> to vector<16x64xf32>
    %156 = arith.addf %154, %155 : vector<16x64xf32>
    %157 = arith.mulf %156, %156 : vector<16x64xf32>
    %158 = arith.mulf %156, %157 : vector<16x64xf32>
    %cst_59 = arith.constant 4.471500e-02 : f32
    %159 = vector.broadcast %cst_59 : f32 to vector<16x64xf32>
    %160 = arith.mulf %159, %158 : vector<16x64xf32>
    %161 = arith.addf %156, %160 : vector<16x64xf32>
    %cst_60 = arith.constant 0.797884583 : f32
    %162 = vector.broadcast %cst_60 : f32 to vector<16x64xf32>
    %163 = arith.mulf %162, %161 : vector<16x64xf32>
    %164 = math.tanh %163 : vector<16x64xf32>
    %cst_61 = arith.constant 1.000000e+00 : f32
    %165 = vector.broadcast %cst_61 : f32 to vector<16x64xf32>
    %166 = arith.addf %165, %164 : vector<16x64xf32>
    %cst_62 = arith.constant 5.000000e-01 : f32
    %167 = vector.broadcast %cst_62 : f32 to vector<16x64xf32>
    %168 = arith.mulf %167, %166 : vector<16x64xf32>
    %169 = arith.mulf %156, %168 : vector<16x64xf32>
    %c0_63 = arith.constant 0 : index
    %c0_64 = arith.constant 0 : index
    %170 = vector.load %arg5[%c0_63, %c0_64] : memref<64x32xbf16, #tpu.memory_space<vmem>>, vector<64x32xbf16>
    %171 = arith.truncf %169 : vector<16x64xf32> to vector<16x64xbf16>
    %cst_65 = arith.constant dense<0.000000e+00> : vector<16x32xf32>
    %172 = tpu.matmul %171, %170, %cst_65 {dimension_numbers = #tpu.dot_dimension_numbers<[1], [0], [0], [1], [0, 0, 1, 1], [], []>} : vector<16x64xbf16>, vector<64x32xbf16>, vector<16x32xf32> -> vector<16x32xf32>
    %173 = arith.addf %129, %172 : vector<16x32xf32>
    %174 = vector.broadcast %5 : vector<1x32xf32> to vector<16x32xf32>
    %175 = arith.addf %173, %174 : vector<16x32xf32>
    %176 = vector.extract_strided_slice %175 {offsets = [0, 0], sizes = [1, 32], strides = [1, 1]} : vector<16x32xf32> to vector<1x32xf32>
    %177 = vector.extract_strided_slice %175 {offsets = [8, 0], sizes = [1, 32], strides = [1, 1]} : vector<16x32xf32> to vector<1x32xf32>
    %cst_66 = arith.constant 0.000000e+00 : f32
    %178 = vector.broadcast %cst_66 : f32 to vector<6x32xf32>
    %179 = tpu.concatenate %176, %177, %178 in 0 : vector<1x32xf32>, vector<1x32xf32>, vector<6x32xf32> -> vector<8x32xf32>
    %cst_67 = arith.constant dense<0.000000e+00> : vector<8xf32>
    %180 = vector.multi_reduction <add>, %179, %cst_67 [1] : vector<8x32xf32> to vector<8xf32>
    %181 = vector.shape_cast %180 : vector<8xf32> to vector<8x1xf32>
    %cst_68 = arith.constant 3.200000e+01 : f32
    %182 = vector.broadcast %cst_68 : f32 to vector<8x1xf32>
    %183 = arith.divf %181, %182 : vector<8x1xf32>
    %184 = vector.broadcast %183 : vector<8x1xf32> to vector<8x32xf32>
    %185 = arith.subf %179, %184 : vector<8x32xf32>
    %186 = arith.mulf %185, %185 : vector<8x32xf32>
    %cst_69 = arith.constant dense<0.000000e+00> : vector<8xf32>
    %187 = vector.multi_reduction <add>, %186, %cst_69 [1] : vector<8x32xf32> to vector<8xf32>
    %188 = vector.shape_cast %187 : vector<8xf32> to vector<8x1xf32>
    %cst_70 = arith.constant 3.200000e+01 : f32
    %189 = vector.broadcast %cst_70 : f32 to vector<8x1xf32>
    %190 = arith.divf %188, %189 : vector<8x1xf32>
    %191 = vector.broadcast %183 : vector<8x1xf32> to vector<8x32xf32>
    %192 = arith.subf %179, %191 : vector<8x32xf32>
    %cst_71 = arith.constant 9.99999974E-6 : f32
    %193 = vector.broadcast %cst_71 : f32 to vector<8x1xf32>
    %194 = arith.addf %190, %193 : vector<8x1xf32>
    %195 = math.rsqrt %194 : vector<8x1xf32>
    %196 = vector.broadcast %195 : vector<8x1xf32> to vector<8x32xf32>
    %197 = arith.mulf %192, %196 : vector<8x32xf32>
    %198 = vector.broadcast %6 : vector<1x32xf32> to vector<8x32xf32>
    %199 = arith.mulf %197, %198 : vector<8x32xf32>
    %200 = vector.broadcast %7 : vector<1x32xf32> to vector<8x32xf32>
    %201 = arith.addf %199, %200 : vector<8x32xf32>
    %c0_72 = arith.constant 0 : index
    %c0_73 = arith.constant 0 : index
    %202 = vector.load %arg6[%c0_72, %c0_73] : memref<32x128xbf16, #tpu.memory_space<vmem>>, vector<32x128xbf16>
    %203 = arith.truncf %201 : vector<8x32xf32> to vector<8x32xbf16>
    %cst_74 = arith.constant dense<0.000000e+00> : vector<8x128xf32>
    %204 = tpu.matmul %203, %202, %cst_74 {dimension_numbers = #tpu.dot_dimension_numbers<[1], [0], [0], [1], [0, 0, 1, 1], [], []>} : vector<8x32xbf16>, vector<32x128xbf16>, vector<8x128xf32> -> vector<8x128xf32>
    %205 = vector.broadcast %10 : vector<1x128xf32> to vector<8x128xf32>
    %206 = arith.addf %204, %205 : vector<8x128xf32>
    %c0_75 = arith.constant 0 : index
    %c0_76 = arith.constant 0 : index
    %207 = vector.load %arg10[%c0_75, %c0_76] : memref<8x128xf32, #tpu.memory_space<vmem>>, vector<8x128xf32>
    tpu.vector_store %arg10[%c0_75, %c0_76], %206 {strides = array<i32>} : memref<8x128xf32, #tpu.memory_space<vmem>>, vector<8x128xf32>,
    return
  }
}

</mosaic_0001>

<llo_original>
// kernel: vit_forward.1
$region0: #{vit_forward.1}
  #allocation0 [shape = 'u32[]', space=smem, size = 0x4, offset = 0x4, fixed_abs, tag = 'smem constant byte address 0x4 - core index']
  #allocation1 [shape = 'u32[144,128]{1,0:T(1,128)}', space=vmem, size = 0x12000, scoped, tag = 'internal scratch']
  %s0 = inlined_call_operand.vmem [shape: bf16[16,256], index: 0, kind: input, shape index: {}]
  %s1 = inlined_call_operand.vmem [shape: bf16[256,32], index: 1, kind: input, shape index: {}]
  %s2 = inlined_call_operand.vmem [shape: bf16[32,768], index: 2, kind: input, shape index: {}]
  %s3 = inlined_call_operand.vmem [shape: bf16[32,32], index: 3, kind: input, shape index: {}]
  %s4 = inlined_call_operand.vmem [shape: bf16[32,64], index: 4, kind: input, shape index: {}]
  %s5 = inlined_call_operand.vmem [shape: bf16[64,32], index: 5, kind: input, shape index: {}]
  %s6 = inlined_call_operand.vmem [shape: bf16[32,128], index: 6, kind: input, shape index: {}]
  %s7 = inlined_call_operand.vmem [shape: f32[16,32], index: 7, kind: input, shape index: {}]
  %s8 = inlined_call_operand.vmem [shape: f32[8,32], index: 8, kind: input, shape index: {}]
  %s9 = inlined_call_operand.vmem [shape: f32[8,768], index: 9, kind: input, shape index: {}]
  %s10 = inlined_call_operand.vmem [shape: f32[8,128], index: 10, kind: output, shape index: {}]
  %s11 = sld [smem:[#allocation0]]
  $region50: #{vit_forward.1} parent=0
    _
  %s13 = ssub.s32 1, %s11
  %s14 = scalar_select 0, %s13, %s11
  // Predicated region
  $region2: #{vit_forward.1} parent=0 // pred_check
    _
  $region3: #{vit_forward.1} parent=0 // pred_check_branch
    %16 = sbr.rel (0) target = $region5
  $region4: #{vit_forward.1} parent=0 // pred_region
    _
  $region5: #{vit_forward.1} parent=0 // pred_fallthru
    _
  // Predicated region
  $region6: #{vit_forward.1} parent=0 // pred_check
    _
  $region7: #{vit_forward.1} parent=0 // pred_check_branch
    %18 = sbr.rel (0) target = $region9
  $region8: #{vit_forward.1} parent=0 // pred_region
    _
  $region9: #{vit_forward.1} parent=0 // pred_fallthru
    _
  // Predicated region
  $region10: #{vit_forward.1} parent=0 // pred_check
    _
  $region11: #{vit_forward.1} parent=0 // pred_check_branch
    %20 = sbr.rel (0) target = $region13
  $region12: #{vit_forward.1} parent=0 // pred_region
    _
  $region13: #{vit_forward.1} parent=0 // pred_fallthru
    _
  // Predicated region
  $region14: #{vit_forward.1} parent=0 // pred_check
    _
  $region15: #{vit_forward.1} parent=0 // pred_check_branch
    %22 = sbr.rel (0) target = $region17
  $region16: #{vit_forward.1} parent=0 // pred_region
    _
  $region17: #{vit_forward.1} parent=0 // pred_fallthru
    _
  // Predicated region
  $region18: #{vit_forward.1} parent=0 // pred_check
    _
  $region19: #{vit_forward.1} parent=0 // pred_check_branch
    %24 = sbr.rel (0) target = $region21
  $region20: #{vit_forward.1} parent=0 // pred_region
    _
  $region21: #{vit_forward.1} parent=0 // pred_fallthru
    _
  // Predicated region
  $region22: #{vit_forward.1} parent=0 // pred_check
    _
  $region23: #{vit_forward.1} parent=0 // pred_check_branch
    %26 = sbr.rel (0) target = $region25
  $region24: #{vit_forward.1} parent=0 // pred_region
    _
  $region25: #{vit_forward.1} parent=0 // pred_fallthru
    _
  // Predicated region
  $region26: #{vit_forward.1} parent=0 // pred_check
    _
  $region27: #{vit_forward.1} parent=0 // pred_check_branch
    %28 = sbr.rel (0) target = $region29
  $region28: #{vit_forward.1} parent=0 // pred_region
    _
  $region29: #{vit_forward.1} parent=0 // pred_fallthru
    _
  // Predicated region
  $region30: #{vit_forward.1} parent=0 // pred_check
    _
  $region31: #{vit_forward.1} parent=0 // pred_check_branch
    %30 = sbr.rel (0) target = $region33
  $region32: #{vit_forward.1} parent=0 // pred_region
    _
  $region33: #{vit_forward.1} parent=0 // pred_fallthru
    _
  // Predicated region
  $region34: #{vit_forward.1} parent=0 // pred_check
    _
  $region35: #{vit_forward.1} parent=0 // pred_check_branch
    %32 = sbr.rel (0) target = $region37
  $region36: #{vit_forward.1} parent=0 // pred_region
    _
  $region37: #{vit_forward.1} parent=0 // pred_fallthru
    _
  // Predicated region
  $region38: #{vit_forward.1} parent=0 // pred_check
    _
  $region39: #{vit_forward.1} parent=0 // pred_check_branch
    %34 = sbr.rel (0) target = $region41
  $region40: #{vit_forward.1} parent=0 // pred_region
    _
  $region41: #{vit_forward.1} parent=0 // pred_fallthru
    _
  %v36 = vld [vmem:[%s8] sm:$0x1]
  %v37 = vld [vmem:[%s8 + $0x1] sm:$0x1]
  %v38 = vld [vmem:[%s8 + $0x2] sm:$0x1]
  %v39 = vld [vmem:[%s8 + $0x3] sm:$0x1]
  %v40 = vld [vmem:[%s8 + $0x4] sm:$0x1]
  %v41 = vld [vmem:[%s8 + $0x5] sm:$0x1]
  %v42 = vld [vmem:[%s8 + $0x6] sm:$0x1]
  %v43 = vld [vmem:[%s8 + $0x7] sm:$0x1]
  %v44 = vld [vmem:[%s9] ss:$8 sm:$0xf]
  %v45 = vld [vmem:[%s9] ss:$8 sm:$0x30]
  %v46 = vor.u32 %v44, %v45
  %v47 = vld [vmem:[%s9 + $0x1] ss:$0 sm:$0xff]
  %v48 = vld [vmem:[%s9 + $0x2] ss:$0 sm:$0xff]
  %v49 = vld [vmem:[%s0] sm:$0xff]
  %v50 = vld [vmem:[%s0 + $0x8] sm:$0xff]
  %v51 = vld [vmem:[%s1] sm:$0xf]
  %v52 = vld [vmem:[%s1 + $0x4] sm:$0xf]
  %v53 = vld [vmem:[%s1 + $0x8] sm:$0xf]
  %v54 = vld [vmem:[%s1 + $0xc] sm:$0xf]
  %v55 = vld [vmem:[%s1 + $0x10] sm:$0xf]
  %v56 = vld [vmem:[%s1 + $0x14] sm:$0xf]
  %v57 = vld [vmem:[%s1 + $0x18] sm:$0xf]
  %v58 = vld [vmem:[%s1 + $0x1c] sm:$0xf]
  %v59 = vld [vmem:[%s1 + $0x20] sm:$0xf]
  %v60 = vld [vmem:[%s1 + $0x24] sm:$0xf]
  %v61 = vld [vmem:[%s1 + $0x28] sm:$0xf]
  %v62 = vld [vmem:[%s1 + $0x2c] sm:$0xf]
  %v63 = vld [vmem:[%s1 + $0x30] sm:$0xf]
  %v64 = vld [vmem:[%s1 + $0x34] sm:$0xf]
  %v65 = vld [vmem:[%s1 + $0x38] sm:$0xf]
  %v66 = vld [vmem:[%s1 + $0x3c] sm:$0xf]
  %v67 = vld [vmem:[%s1 + $0x40] sm:$0xf]
  %v68 = vld [vmem:[%s1 + $0x44] sm:$0xf]
  %v69 = vld [vmem:[%s1 + $0x48] sm:$0xf]
  %v70 = vld [vmem:[%s1 + $0x4c] sm:$0xf]
  %v71 = vld [vmem:[%s1 + $0x50] sm:$0xf]
  %v72 = vld [vmem:[%s1 + $0x54] sm:$0xf]
  %v73 = vld [vmem:[%s1 + $0x58] sm:$0xf]
  %v74 = vld [vmem:[%s1 + $0x5c] sm:$0xf]
  %v75 = vld [vmem:[%s1 + $0x60] sm:$0xf]
  %v76 = vld [vmem:[%s1 + $0x64] sm:$0xf]
  %v77 = vld [vmem:[%s1 + $0x68] sm:$0xf]
  %v78 = vld [vmem:[%s1 + $0x6c] sm:$0xf]
  %v79 = vld [vmem:[%s1 + $0x70] sm:$0xf]
  %v80 = vld [vmem:[%s1 + $0x74] sm:$0xf]
  %v81 = vld [vmem:[%s1 + $0x78] sm:$0xf]
  %v82 = vld [vmem:[%s1 + $0x7c] sm:$0xf]
  %v83 = vld [vmem:[%s7] sm:$0xff]
  %v84 = vld [vmem:[%s7 + $0x8] sm:$0xff]
  %v87 = vunpack.c.l.b16 %v49
  %v88 = vunpack.c.h.b16 %v49
  %v89 = vunpack.c.l.b16 %v50
  %v90 = vunpack.c.h.b16 %v50
  %v91 = vpack.c.b16 %v89, %v87
  %v92 = vpack.c.b16 %v90, %v88
  %v127 = vunpack.c.l.b16 %v51
  %v128 = vunpack.c.l.b16 %v52
  %v129 = vunpack.c.l.b16 %v53
  %v130 = vunpack.c.l.b16 %v54
  %v131 = vunpack.c.l.b16 %v55
  %v132 = vunpack.c.l.b16 %v56
  %v133 = vunpack.c.l.b16 %v57
  %v134 = vunpack.c.l.b16 %v58
  %v135 = vunpack.c.l.b16 %v59
  %v136 = vunpack.c.l.b16 %v60
  %v137 = vunpack.c.l.b16 %v61
  %v138 = vunpack.c.l.b16 %v62
  %v139 = vunpack.c.l.b16 %v63
  %v140 = vunpack.c.l.b16 %v64
  %v141 = vunpack.c.l.b16 %v65
  %v142 = vunpack.c.l.b16 %v66
  %v143 = vunpack.c.l.b16 %v67
  %v144 = vunpack.c.l.b16 %v68
  %v145 = vunpack.c.l.b16 %v69
  %v146 = vunpack.c.l.b16 %v70
  %v147 = vunpack.c.l.b16 %v71
  %v148 = vunpack.c.l.b16 %v72
  %v149 = vunpack.c.l.b16 %v73
  %v150 = vunpack.c.l.b16 %v74
  %v151 = vunpack.c.l.b16 %v75
  %v152 = vunpack.c.l.b16 %v76
  %v153 = vunpack.c.l.b16 %v77
  %v154 = vunpack.c.l.b16 %v78
  %v155 = vunpack.c.l.b16 %v79
  %v156 = vunpack.c.l.b16 %v80
  %v157 = vunpack.c.l.b16 %v81
  %v158 = vunpack.c.l.b16 %v82
  %v159 = vpack.c.b16 %v128, %v127
  %v160 = vpack.c.b16 %v130, %v129
  %v161 = vpack.c.b16 %v132, %v131
  %v162 = vpack.c.b16 %v134, %v133
  %v163 = vpack.c.b16 %v136, %v135
  %v164 = vpack.c.b16 %v138, %v137
  %v165 = vpack.c.b16 %v140, %v139
  %v166 = vpack.c.b16 %v142, %v141
  %v167 = vpack.c.b16 %v144, %v143
  %v168 = vpack.c.b16 %v146, %v145
  %v169 = vpack.c.b16 %v148, %v147
  %v170 = vpack.c.b16 %v150, %v149
  %v171 = vpack.c.b16 %v152, %v151
  %v172 = vpack.c.b16 %v154, %v153
  %v173 = vpack.c.b16 %v156, %v155
  %v174 = vpack.c.b16 %v158, %v157
  %191 = vmatprep.subr.bf16.mxu0 0
  %192 = vmatpush1.bf16.msra.mxu0 %v166
  %193 = vmatprep.subr.bf16.mxu0 0
  %194 = vmatpush1.bf16.msra.mxu0 %v165
  %195 = vmatprep.subr.bf16.mxu0 0
  %196 = vmatpush1.bf16.msra.mxu0 %v164
  %197 = vmatprep.subr.bf16.mxu0 0
  %198 = vmatpush1.bf16.msra.mxu0 %v163
  %199 = vmatprep.subr.bf16.mxu0 0
  %200 = vmatpush1.bf16.msra.mxu0 %v162
  %201 = vmatprep.subr.bf16.mxu0 0
  %202 = vmatpush1.bf16.msra.mxu0 %v161
  %203 = vmatprep.subr.bf16.mxu0 0
  %204 = vmatpush1.bf16.msra.mxu0 %v160
  %205 = vmatprep.subr.bf16.mxu0 0
  %206 = vmatpush1.bf16.msra.mxu0 %v159
  %207 = vmatprep.subr.bf16.mxu0 0
  %208 = vmatpush2.bf16.msra.mxu0 %v174
  %209 = vmatprep.subr.bf16.mxu0 0
  %210 = vmatpush2.bf16.msra.mxu0 %v173
  %211 = vmatprep.subr.bf16.mxu0 0
  %212 = vmatpush2.bf16.msra.mxu0 %v172
  %213 = vmatprep.subr.bf16.mxu0 0
  %214 = vmatpush2.bf16.msra.mxu0 %v171
  %215 = vmatprep.subr.bf16.mxu0 0
  %216 = vmatpush2.bf16.msra.mxu0 %v170
  %217 = vmatprep.subr.bf16.mxu0 0
  %218 = vmatpush2.bf16.msra.mxu0 %v169
  %219 = vmatprep.subr.bf16.mxu0 0
  %220 = vmatpush2.bf16.msra.mxu0 %v168
  %221 = vmatprep.subr.bf16.mxu0 0
  %222 = vmatpush2.bf16.msra.mxu0 %v167
  %223 = vmatprep.mubr.bf16.mxu0 %v92
  %224 = vmatmul.mubr.bf16.gmra.mxu0 %v91
  %v225 = vpop.f32.mrf.mxu0
  %v226 = vadd.f32 %v83, %v225
  %v227 = vpop.f32.mrf.mxu0
  %v228 = vpop.f32.mrf.mxu0
  %v229 = vadd.f32 %v84, %v228
  %v230 = vpop.f32.mrf.mxu0
  %231 = vdwg.mxu0
  %vm232 = vcmask 261120
  %v233 = vsel %vm232, %v226, 0.0
  %234 = vadd.xlane.f32.xlu0 %v233
  %v235 = vpop.xlane.xlu0 %234
  %v236 = vsel %vm232, %v229, 0.0
  %237 = vadd.xlane.f32.xlu0 %v236
  %v238 = vpop.xlane.xlu0 %237
  %v239 = vrcp.pop 32.0
  %v240 = vmul.f32 %v235, %v239
  %v241 = vmul.f32 %v238, %v239
  %v242 = vsub.f32 %v226, %v240
  %v243 = vsub.f32 %v229, %v241
  %v244 = vmul.f32 %v242, %v242
  %v245 = vmul.f32 %v243, %v243
  %v246 = vsel %vm232, %v244, 0.0
  %247 = vadd.xlane.f32.xlu0 %v246
  %v248 = vpop.xlane.xlu0 %247
  %v249 = vsel %vm232, %v245, 0.0
  %250 = vadd.xlane.f32.xlu0 %v249
  %v251 = vpop.xlane.xlu0 %250
  %v252 = vmul.f32 %v248, %v239
  %v253 = vmul.f32 %v251, %v239
  %v254 = vadd.f32 %v252, 1e-05
  %v255 = vadd.f32 %v253, 1e-05
  %v256 = vrsqrt.pop %v254
  %v257 = vrsqrt.pop %v255
  %v258 = vmul.f32 %v242, %v256
  %v259 = vmul.f32 %v243, %v257
  %v260 = vlaneseq
  %v261 = vshrl.u32 %v260, 7
  %v262 = vsub.s32 0, %v261
  %v263 = vrot.slane %v36, %v262
  %v264 = vmul.f32 %v258, %v263
  %v265 = vmul.f32 %v259, %v263
  %v266 = vlaneseq
  %v267 = vshrl.u32 %v266, 7
  %v268 = vsub.s32 0, %v267
  %v269 = vrot.slane %v37, %v268
  %v270 = vadd.f32 %v264, %v269
  %v271 = vadd.f32 %v265, %v269
  %v272 = vld [vmem:[%s2] sm:$0xff]
  %v273 = vld [vmem:[%s2 + $0x8] sm:$0xff]
  %v274 = vld [vmem:[%s2 + $0x10] sm:$0xff]
  %v275 = vld [vmem:[%s2 + $0x18] sm:$0xff]
  %v276 = vld [vmem:[%s2 + $0x20] sm:$0xff]
  %v277 = vld [vmem:[%s2 + $0x28] sm:$0xff]
  %v278 = vld [vmem:[%s2 + $0x30] sm:$0xff]
  %v279 = vld [vmem:[%s2 + $0x38] sm:$0xff]
  %v280 = vld [vmem:[%s2 + $0x40] sm:$0xff]
  %v281 = vld [vmem:[%s2 + $0x48] sm:$0xff]
  %v282 = vld [vmem:[%s2 + $0x50] sm:$0xff]
  %v283 = vld [vmem:[%s2 + $0x58] sm:$0xff]
  %v284 = vpack.c.bf16 %v271, %v270
  %v286 = vlaneseq
  %v287 = vshrl.u32 %v286, 7
  %v288 = vsub.s32 0, %v287
  %v289 = vrot.slane %v46, %v288
  %v290 = vlaneseq
  %v291 = vshrl.u32 %v290, 7
  %v292 = vsub.s32 1, %v291
  %v293 = vrot.slane %v46, %v292
  %v294 = vlaneseq
  %v295 = vshrl.u32 %v294, 7
  %v296 = vsub.s32 2, %v295
  %v297 = vrot.slane %v46, %v296
  %v298 = vlaneseq
  %v299 = vshrl.u32 %v298, 7
  %v300 = vsub.s32 3, %v299
  %v301 = vrot.slane %v46, %v300
  %v302 = vlaneseq
  %v303 = vshrl.u32 %v302, 7
  %v304 = vsub.s32 4, %v303
  %v305 = vrot.slane %v46, %v304
  %v306 = vlaneseq
  %v307 = vshrl.u32 %v306, 7
  %v308 = vsub.s32 5, %v307
  %v309 = vrot.slane %v46, %v308
  %v328 = vunpack.c.l.b16 %v272
  %v329 = vunpack.c.h.b16 %v272
  %v330 = vunpack.c.l.b16 %v273
  %v331 = vunpack.c.h.b16 %v273
  %v332 = vunpack.c.l.b16 %v274
  %v333 = vunpack.c.h.b16 %v274
  %v334 = vunpack.c.l.b16 %v275
  %v335 = vunpack.c.h.b16 %v275
  %v336 = vunpack.c.l.b16 %v276
  %v337 = vunpack.c.h.b16 %v276
  %v338 = vunpack.c.l.b16 %v277
  %v339 = vunpack.c.h.b16 %v277
  %v340 = vunpack.c.l.b16 %v278
  %v341 = vunpack.c.h.b16 %v278
  %v342 = vunpack.c.l.b16 %v279
  %v343 = vunpack.c.h.b16 %v279
  %v344 = vunpack.c.l.b16 %v280
  %v345 = vunpack.c.h.b16 %v280
  %v346 = vunpack.c.l.b16 %v281
  %v347 = vunpack.c.h.b16 %v281
  %v348 = vunpack.c.l.b16 %v282
  %v349 = vunpack.c.h.b16 %v282
  %v350 = vunpack.c.l.b16 %v283
  %v351 = vunpack.c.h.b16 %v283
  %v352 = vpack.c.b16 %v334, %v328
  %v353 = vpack.c.b16 %v335, %v329
  %v354 = vpack.c.b16 %v336, %v330
  %v355 = vpack.c.b16 %v337, %v331
  %v356 = vpack.c.b16 %v338, %v332
  %v357 = vpack.c.b16 %v339, %v333
  %v358 = vpack.c.b16 %v346, %v340
  %v359 = vpack.c.b16 %v347, %v341
  %v360 = vpack.c.b16 %v348, %v342
  %v361 = vpack.c.b16 %v349, %v343
  %v362 = vpack.c.b16 %v350, %v344
  %v363 = vpack.c.b16 %v351, %v345
  %v377 = vsel %vm232, %v284, 0
  %379 = vmatprep.subr.bf16.mxu0 0
  %380 = vmatpush1.bf16.msra.mxu0 0
  %381 = vmatprep.subr.bf16.mxu0 0
  %382 = vmatpush1.bf16.msra.mxu0 0
  %383 = vmatprep.subr.bf16.mxu0 0
  %384 = vmatpush1.bf16.msra.mxu0 0
  %385 = vmatprep.subr.bf16.mxu0 0
  %386 = vmatpush1.bf16.msra.mxu0 0
  %387 = vmatprep.subr.bf16.mxu0 0
  %388 = vmatpush1.bf16.msra.mxu0 0
  %389 = vmatprep.subr.bf16.mxu0 0
  %390 = vmatpush1.bf16.msra.mxu0 0
  %391 = vmatprep.subr.bf16.mxu0 %v359
  %392 = vmatpush1.bf16.msra.mxu0 %v358
  %393 = vmatprep.subr.bf16.mxu0 %v353
  %394 = vmatpush1.bf16.msra.mxu0 %v352
  %395 = vmatprep.subr.bf16.mxu0 0
  %396 = vmatpush2.bf16.msra.mxu0 0
  %397 = vmatprep.subr.bf16.mxu0 0
  %398 = vmatpush2.bf16.msra.mxu0 0
  %399 = vmatprep.subr.bf16.mxu0 0
  %400 = vmatpush2.bf16.msra.mxu0 0
  %401 = vmatprep.subr.bf16.mxu0 0
  %402 = vmatpush2.bf16.msra.mxu0 0
  %403 = vmatprep.subr.bf16.mxu0 0
  %404 = vmatpush2.bf16.msra.mxu0 0
  %405 = vmatprep.subr.bf16.mxu0 0
  %406 = vmatpush2.bf16.msra.mxu0 0
  %407 = vmatprep.subr.bf16.mxu0 0
  %408 = vmatpush2.bf16.msra.mxu0 0
  %409 = vmatprep.subr.bf16.mxu0 0
  %410 = vmatpush2.bf16.msra.mxu0 0
  %411 = vmatprep.mubr.bf16.mxu0 0
  %412 = vmatmul.mubr.bf16.gmra.mxu0 %v377
  %v413 = vpop.f32.mrf.mxu0
  %v414 = vadd.f32 %v289, %v413
  %v415 = vpop.f32.mrf.mxu0
  %v416 = vadd.f32 %v293, %v415
  %v417 = vpop.f32.mrf.mxu0
  %v418 = vadd.f32 %v289, %v417
  %v419 = vpop.f32.mrf.mxu0
  %v420 = vadd.f32 %v293, %v419
  %421 = vdwg.mxu0
  %422 = vmatprep.subr.bf16.mxu0 0
  %423 = vmatpush1.bf16.msra.mxu0 0
  %424 = vmatprep.subr.bf16.mxu0 0
  %425 = vmatpush1.bf16.msra.mxu0 0
  %426 = vmatprep.subr.bf16.mxu0 0
  %427 = vmatpush1.bf16.msra.mxu0 0
  %428 = vmatprep.subr.bf16.mxu0 0
  %429 = vmatpush1.bf16.msra.mxu0 0
  %430 = vmatprep.subr.bf16.mxu0 0
  %431 = vmatpush1.bf16.msra.mxu0 0
  %432 = vmatprep.subr.bf16.mxu0 0
  %433 = vmatpush1.bf16.msra.mxu0 0
  %434 = vmatprep.subr.bf16.mxu0 %v361
  %435 = vmatpush1.bf16.msra.mxu0 %v360
  %436 = vmatprep.subr.bf16.mxu0 %v355
  %437 = vmatpush1.bf16.msra.mxu0 %v354
  %438 = vmatprep.subr.bf16.mxu0 0
  %439 = vmatpush2.bf16.msra.mxu0 0
  %440 = vmatprep.subr.bf16.mxu0 0
  %441 = vmatpush2.bf16.msra.mxu0 0
  %442 = vmatprep.subr.bf16.mxu0 0
  %443 = vmatpush2.bf16.msra.mxu0 0
  %444 = vmatprep.subr.bf16.mxu0 0
  %445 = vmatpush2.bf16.msra.mxu0 0
  %446 = vmatprep.subr.bf16.mxu0 0
  %447 = vmatpush2.bf16.msra.mxu0 0
  %448 = vmatprep.subr.bf16.mxu0 0
  %449 = vmatpush2.bf16.msra.mxu0 0
  %450 = vmatprep.subr.bf16.mxu0 0
  %451 = vmatpush2.bf16.msra.mxu0 0
  %452 = vmatprep.subr.bf16.mxu0 0
  %453 = vmatpush2.bf16.msra.mxu0 0
  %454 = vmatprep.mubr.bf16.mxu0 0
  %455 = vmatmul.mubr.bf16.gmra.mxu0 %v377
  %v456 = vpop.f32.mrf.mxu0
  %v457 = vadd.f32 %v297, %v456
  %v458 = vpop.f32.mrf.mxu0
  %v459 = vadd.f32 %v301, %v458
  %v460 = vpop.f32.mrf.mxu0
  %v461 = vadd.f32 %v297, %v460
  %v462 = vpop.f32.mrf.mxu0
  %v463 = vadd.f32 %v301, %v462
  %464 = vdwg.mxu0
  %465 = vmatprep.subr.bf16.mxu0 0
  %466 = vmatpush1.bf16.msra.mxu0 0
  %467 = vmatprep.subr.bf16.mxu0 0
  %468 = vmatpush1.bf16.msra.mxu0 0
  %469 = vmatprep.subr.bf16.mxu0 0
  %470 = vmatpush1.bf16.msra.mxu0 0
  %471 = vmatprep.subr.bf16.mxu0 0
  %472 = vmatpush1.bf16.msra.mxu0 0
  %473 = vmatprep.subr.bf16.mxu0 0
  %474 = vmatpush1.bf16.msra.mxu0 0
  %475 = vmatprep.subr.bf16.mxu0 0
  %476 = vmatpush1.bf16.msra.mxu0 0
  %477 = vmatprep.subr.bf16.mxu0 %v363
  %478 = vmatpush1.bf16.msra.mxu0 %v362
  %479 = vmatprep.subr.bf16.mxu0 %v357
  %480 = vmatpush1.bf16.msra.mxu0 %v356
  %481 = vmatprep.subr.bf16.mxu0 0
  %482 = vmatpush2.bf16.msra.mxu0 0
  %483 = vmatprep.subr.bf16.mxu0 0
  %484 = vmatpush2.bf16.msra.mxu0 0
  %485 = vmatprep.subr.bf16.mxu0 0
  %486 = vmatpush2.bf16.msra.mxu0 0
  %487 = vmatprep.subr.bf16.mxu0 0
  %488 = vmatpush2.bf16.msra.mxu0 0
  %489 = vmatprep.subr.bf16.mxu0 0
  %490 = vmatpush2.bf16.msra.mxu0 0
  %491 = vmatprep.subr.bf16.mxu0 0
  %492 = vmatpush2.bf16.msra.mxu0 0
  %493 = vmatprep.subr.bf16.mxu0 0
  %494 = vmatpush2.bf16.msra.mxu0 0
  %495 = vmatprep.subr.bf16.mxu0 0
  %496 = vmatpush2.bf16.msra.mxu0 0
  %497 = vmatprep.mubr.bf16.mxu0 0
  %498 = vmatmul.mubr.bf16.gmra.mxu0 %v377
  %v499 = vpop.f32.mrf.mxu0
  %v500 = vadd.f32 %v305, %v499
  %v501 = vpop.f32.mrf.mxu0
  %v502 = vadd.f32 %v309, %v501
  %v503 = vpop.f32.mrf.mxu0
  %v504 = vadd.f32 %v305, %v503
  %v505 = vpop.f32.mrf.mxu0
  %v506 = vadd.f32 %v309, %v505
  %507 = vdwg.mxu0
  %v508 = vpack.c.bf16 %v418, %v414
  %v509 = vpack.c.bf16 %v420, %v416
  %v510 = vpack.c.bf16 %v461, %v457
  %v511 = vpack.c.bf16 %v463, %v459
  %v512 = vpack.c.bf16 %v504, %v500
  %v513 = vpack.c.bf16 %v506, %v502
  %v514 = vlaneseq
  %v515 = vand.u32 %v514, 127
  %vm516 = vcmp.lt.s32.totalorder %v515, 5
  %vm517 = vcmask 130048
  %v519 = vsel %vm517, %v508, 0
  %v522 = vsel %vm517, %v509, 0
  %524 = vmatprep.subr.bf16.mxu0 0
  %525 = vmatpush1.bf16.xpose.msra.mxu0 0
  %526 = vmatprep.subr.bf16.mxu0 0
  %527 = vmatpush1.bf16.xpose.msra.mxu0 0
  %528 = vmatprep.subr.bf16.mxu0 0
  %529 = vmatpush1.bf16.xpose.msra.mxu0 0
  %530 = vmatprep.subr.bf16.mxu0 0
  %531 = vmatpush1.bf16.xpose.msra.mxu0 0
  %532 = vmatprep.subr.bf16.mxu0 0
  %533 = vmatpush1.bf16.xpose.msra.mxu0 0
  %534 = vmatprep.subr.bf16.mxu0 0
  %535 = vmatpush1.bf16.xpose.msra.mxu0 0
  %536 = vmatprep.subr.bf16.mxu0 0
  %537 = vmatpush1.bf16.xpose.msra.mxu0 0
  %538 = vmatprep.subr.bf16.mxu0 0
  %539 = vmatpush1.bf16.xpose.msra.mxu0 %v522
  %540 = vmatprep.subr.bf16.mxu0 0
  %541 = vmatpush2.bf16.xpose.msra.mxu0 0
  %542 = vmatprep.subr.bf16.mxu0 0
  %543 = vmatpush2.bf16.xpose.msra.mxu0 0
  %544 = vmatprep.subr.bf16.mxu0 0
  %545 = vmatpush2.bf16.xpose.msra.mxu0 0
  %546 = vmatprep.subr.bf16.mxu0 0
  %547 = vmatpush2.bf16.xpose.msra.mxu0 0
  %548 = vmatprep.subr.bf16.mxu0 0
  %549 = vmatpush2.bf16.xpose.msra.mxu0 0
  %550 = vmatprep.subr.bf16.mxu0 0
  %551 = vmatpush2.bf16.xpose.msra.mxu0 0
  %552 = vmatprep.subr.bf16.mxu0 0
  %553 = vmatpush2.bf16.xpose.msra.mxu0 0
  %554 = vmatprep.subr.bf16.mxu0 0
  %555 = vmatpush2.bf16.xpose.msra.mxu0 0
  %556 = vmatprep.mubr.bf16.mxu0 0
  %557 = vmatmul.mubr.bf16.gmra.mxu0 %v519
  %v558 = vpop.f32.mrf.mxu0
  %v559 = vadd.f32 0.0, %v558
  %v560 = vpop.f32.mrf.mxu0
  %v561 = vpop.f32.mrf.mxu0
  %v562 = vpop.f32.mrf.mxu0
  %563 = vdwg.mxu0
  %v564 = vsel %vm516, %v559, -1e+30
  %vm565 = vcmask 64512
  %v566 = vsel %vm565, %v564, -inf
  %567 = vmax.xlane.f32.xlu0 %v566
  %v568 = vpop.xlane.xlu0 %567
  %v569 = vsub.f32 %v564, %v568
  %v570 = vmul.f32 %v569, 1.442695
  %v571 = vpow.pop %v570
  %v572 = vsel %vm565, %v571, 0.0
  %573 = vadd.xlane.f32.xlu0 %v572
  %v574 = vpop.xlane.xlu0 %573
  %v575 = vrcp.pop %v574
  %v576 = vmul.f32 %v571, %v575
  %v577 = vpack.c.bf16 %v576, %v576
  %v579 = vsel %vm565, %v577, 0
  %vm581 = vcmask 1043456
  %v583 = vsel %vm581, %v510, 0
  %585 = vmatprep.subr.bf16.mxu0 0
  %586 = vmatpush1.bf16.msra.mxu0 0
  %587 = vmatprep.subr.bf16.mxu0 0
  %588 = vmatpush1.bf16.msra.mxu0 0
  %589 = vmatprep.subr.bf16.mxu0 0
  %590 = vmatpush1.bf16.msra.mxu0 0
  %591 = vmatprep.subr.bf16.mxu0 0
  %592 = vmatpush1.bf16.msra.mxu0 0
  %593 = vmatprep.subr.bf16.mxu0 0
  %594 = vmatpush1.bf16.msra.mxu0 0
  %595 = vmatprep.subr.bf16.mxu0 0
  %596 = vmatpush1.bf16.msra.mxu0 0
  %597 = vmatprep.subr.bf16.mxu0 0
  %598 = vmatpush1.bf16.msra.mxu0 0
  %599 = vmatprep.subr.bf16.mxu0 0
  %600 = vmatpush1.bf16.msra.mxu0 %v583
  %601 = vmatprep.subr.bf16.mxu0 0
  %602 = vmatpush2.bf16.msra.mxu0 0
  %603 = vmatprep.subr.bf16.mxu0 0
  %604 = vmatpush2.bf16.msra.mxu0 0
  %605 = vmatprep.subr.bf16.mxu0 0
  %606 = vmatpush2.bf16.msra.mxu0 0
  %607 = vmatprep.subr.bf16.mxu0 0
  %608 = vmatpush2.bf16.msra.mxu0 0
  %609 = vmatprep.subr.bf16.mxu0 0
  %610 = vmatpush2.bf16.msra.mxu0 0
  %611 = vmatprep.subr.bf16.mxu0 0
  %612 = vmatpush2.bf16.msra.mxu0 0
  %613 = vmatprep.subr.bf16.mxu0 0
  %614 = vmatpush2.bf16.msra.mxu0 0
  %615 = vmatprep.subr.bf16.mxu0 0
  %616 = vmatpush2.bf16.msra.mxu0 0
  %617 = vmatprep.mubr.bf16.mxu0 0
  %618 = vmatmul.mubr.bf16.gmra.mxu0 %v579
  %v619 = vpop.f32.mrf.mxu0
  %v620 = vadd.f32 0.0, %v619
  %v621 = vpop.f32.mrf.mxu0
  %v622 = vpop.f32.mrf.mxu0
  %v623 = vpop.f32.mrf.mxu0
  %624 = vdwg.mxu0
  %v626 = vsel %vm517, %v511, 0
  %v629 = vsel %vm517, %v512, 0
  %631 = vmatprep.subr.bf16.mxu0 0
  %632 = vmatpush1.bf16.xpose.msra.mxu0 0
  %633 = vmatprep.subr.bf16.mxu0 0
  %634 = vmatpush1.bf16.xpose.msra.mxu0 0
  %635 = vmatprep.subr.bf16.mxu0 0
  %636 = vmatpush1.bf16.xpose.msra.mxu0 0
  %637 = vmatprep.subr.bf16.mxu0 0
  %638 = vmatpush1.bf16.xpose.msra.mxu0 0
  %639 = vmatprep.subr.bf16.mxu0 0
  %640 = vmatpush1.bf16.xpose.msra.mxu0 0
  %641 = vmatprep.subr.bf16.mxu0 0
  %642 = vmatpush1.bf16.xpose.msra.mxu0 0
  %643 = vmatprep.subr.bf16.mxu0 0
  %644 = vmatpush1.bf16.xpose.msra.mxu0 0
  %645 = vmatprep.subr.bf16.mxu0 0
  %646 = vmatpush1.bf16.xpose.msra.mxu0 %v629
  %647 = vmatprep.subr.bf16.mxu0 0
  %648 = vmatpush2.bf16.xpose.msra.mxu0 0
  %649 = vmatprep.subr.bf16.mxu0 0
  %650 = vmatpush2.bf16.xpose.msra.mxu0 0
  %651 = vmatprep.subr.bf16.mxu0 0
  %652 = vmatpush2.bf16.xpose.msra.mxu0 0
  %653 = vmatprep.subr.bf16.mxu0 0
  %654 = vmatpush2.bf16.xpose.msra.mxu0 0
  %655 = vmatprep.subr.bf16.mxu0 0
  %656 = vmatpush2.bf16.xpose.msra.mxu0 0
  %657 = vmatprep.subr.bf16.mxu0 0
  %658 = vmatpush2.bf16.xpose.msra.mxu0 0
  %659 = vmatprep.subr.bf16.mxu0 0
  %660 = vmatpush2.bf16.xpose.msra.mxu0 0
  %661 = vmatprep.subr.bf16.mxu0 0
  %662 = vmatpush2.bf16.xpose.msra.mxu0 0
  %663 = vmatprep.mubr.bf16.mxu0 0
  %664 = vmatmul.mubr.bf16.gmra.mxu0 %v626
  %v665 = vpop.f32.mrf.mxu0
  %v666 = vadd.f32 0.0, %v665
  %v667 = vpop.f32.mrf.mxu0
  %v668 = vpop.f32.mrf.mxu0
  %v669 = vpop.f32.mrf.mxu0
  %670 = vdwg.mxu0
  %v671 = vsel %vm516, %v666, -1e+30
  %v672 = vsel %vm565, %v671, -inf
  %673 = vmax.xlane.f32.xlu0 %v672
  %v674 = vpop.xlane.xlu0 %673
  %v675 = vsub.f32 %v671, %v674
  %v676 = vmul.f32 %v675, 1.442695
  %v677 = vpow.pop %v676
  %v678 = vsel %vm565, %v677, 0.0
  %679 = vadd.xlane.f32.xlu0 %v678
  %v680 = vpop.xlane.xlu0 %679
  %v681 = vrcp.pop %v680
  %v682 = vmul.f32 %v677, %v681
  %v683 = vpack.c.bf16 %v682, %v682
  %v685 = vsel %vm565, %v683, 0
  %v688 = vsel %vm581, %v513, 0
  %690 = vmatprep.subr.bf16.mxu0 0
  %691 = vmatpush1.bf16.msra.mxu0 0
  %692 = vmatprep.subr.bf16.mxu0 0
  %693 = vmatpush1.bf16.msra.mxu0 0
  %694 = vmatprep.subr.bf16.mxu0 0
  %695 = vmatpush1.bf16.msra.mxu0 0
  %696 = vmatprep.subr.bf16.mxu0 0
  %697 = vmatpush1.bf16.msra.mxu0 0
  %698 = vmatprep.subr.bf16.mxu0 0
  %699 = vmatpush1.bf16.msra.mxu0 0
  %700 = vmatprep.subr.bf16.mxu0 0
  %701 = vmatpush1.bf16.msra.mxu0 0
  %702 = vmatprep.subr.bf16.mxu0 0
  %703 = vmatpush1.bf16.msra.mxu0 0
  %704 = vmatprep.subr.bf16.mxu0 0
  %705 = vmatpush1.bf16.msra.mxu0 %v688
  %706 = vmatprep.subr.bf16.mxu0 0
  %707 = vmatpush2.bf16.msra.mxu0 0
  %708 = vmatprep.subr.bf16.mxu0 0
  %709 = vmatpush2.bf16.msra.mxu0 0
  %710 = vmatprep.subr.bf16.mxu0 0
  %711 = vmatpush2.bf16.msra.mxu0 0
  %712 = vmatprep.subr.bf16.mxu0 0
  %713 = vmatpush2.bf16.msra.mxu0 0
  %714 = vmatprep.subr.bf16.mxu0 0
  %715 = vmatpush2.bf16.msra.mxu0 0
  %716 = vmatprep.subr.bf16.mxu0 0
  %717 = vmatpush2.bf16.msra.mxu0 0
  %718 = vmatprep.subr.bf16.mxu0 0
  %719 = vmatpush2.bf16.msra.mxu0 0
  %720 = vmatprep.subr.bf16.mxu0 0
  %721 = vmatpush2.bf16.msra.mxu0 0
  %722 = vmatprep.mubr.bf16.mxu0 0
  %723 = vmatmul.mubr.bf16.gmra.mxu0 %v685
  %v724 = vpop.f32.mrf.mxu0
  %v725 = vadd.f32 0.0, %v724
  %v726 = vpop.f32.mrf.mxu0
  %v727 = vpop.f32.mrf.mxu0
  %v728 = vpop.f32.mrf.mxu0
  %729 = vdwg.mxu0
  %731 = vrot.lane.b32.xlu0 %v725, 16
  %v732 = vpop.permute.xlu0 %731
  %v734 = vsel %vm517, %v620, %v732
  %v736 = vrot.slane %v508, 4
  %v738 = vrot.slane %v509, 4
  %v740 = vsel %vm517, %v736, 0
  %v743 = vsel %vm517, %v738, 0
  %745 = vmatprep.subr.bf16.mxu0 0
  %746 = vmatpush1.bf16.xpose.msra.mxu0 0
  %747 = vmatprep.subr.bf16.mxu0 0
  %748 = vmatpush1.bf16.xpose.msra.mxu0 0
  %749 = vmatprep.subr.bf16.mxu0 0
  %750 = vmatpush1.bf16.xpose.msra.mxu0 0
  %751 = vmatprep.subr.bf16.mxu0 0
  %752 = vmatpush1.bf16.xpose.msra.mxu0 0
  %753 = vmatprep.subr.bf16.mxu0 0
  %754 = vmatpush1.bf16.xpose.msra.mxu0 0
  %755 = vmatprep.subr.bf16.mxu0 0
  %756 = vmatpush1.bf16.xpose.msra.mxu0 0
  %757 = vmatprep.subr.bf16.mxu0 0
  %758 = vmatpush1.bf16.xpose.msra.mxu0 0
  %759 = vmatprep.subr.bf16.mxu0 0
  %760 = vmatpush1.bf16.xpose.msra.mxu0 %v743
  %761 = vmatprep.subr.bf16.mxu0 0
  %762 = vmatpush2.bf16.xpose.msra.mxu0 0
  %763 = vmatprep.subr.bf16.mxu0 0
  %764 = vmatpush2.bf16.xpose.msra.mxu0 0
  %765 = vmatprep.subr.bf16.mxu0 0
  %766 = vmatpush2.bf16.xpose.msra.mxu0 0
  %767 = vmatprep.subr.bf16.mxu0 0
  %768 = vmatpush2.bf16.xpose.msra.mxu0 0
  %769 = vmatprep.subr.bf16.mxu0 0
  %770 = vmatpush2.bf16.xpose.msra.mxu0 0
  %771 = vmatprep.subr.bf16.mxu0 0
  %772 = vmatpush2.bf16.xpose.msra.mxu0 0
  %773 = vmatprep.subr.bf16.mxu0 0
  %774 = vmatpush2.bf16.xpose.msra.mxu0 0
  %775 = vmatprep.subr.bf16.mxu0 0
  %776 = vmatpush2.bf16.xpose.msra.mxu0 0
  %777 = vmatprep.mubr.bf16.mxu0 0
  %778 = vmatmul.mubr.bf16.gmra.mxu0 %v740
  %v779 = vpop.f32.mrf.mxu0
  %v780 = vadd.f32 0.0, %v779
  %v781 = vpop.f32.mrf.mxu0
  %v782 = vpop.f32.mrf.mxu0
  %v783 = vpop.f32.mrf.mxu0
  %784 = vdwg.mxu0
  %v785 = vsel %vm516, %v780, -1e+30
  %v786 = vsel %vm565, %v785, -inf
  %787 = vmax.xlane.f32.xlu0 %v786
  %v788 = vpop.xlane.xlu0 %787
  %v789 = vsub.f32 %v785, %v788
  %v790 = vmul.f32 %v789, 1.442695
  %v791 = vpow.pop %v790
  %v792 = vsel %vm565, %v791, 0.0
  %793 = vadd.xlane.f32.xlu0 %v792
  %v794 = vpop.xlane.xlu0 %793
  %v795 = vrcp.pop %v794
  %v796 = vmul.f32 %v791, %v795
  %v797 = vpack.c.bf16 %v796, %v796
  %v799 = vrot.slane %v510, 4
  %v801 = vsel %vm565, %v797, 0
  %v804 = vsel %vm581, %v799, 0
  %806 = vmatprep.subr.bf16.mxu0 0
  %807 = vmatpush1.bf16.msra.mxu0 0
  %808 = vmatprep.subr.bf16.mxu0 0
  %809 = vmatpush1.bf16.msra.mxu0 0
  %810 = vmatprep.subr.bf16.mxu0 0
  %811 = vmatpush1.bf16.msra.mxu0 0
  %812 = vmatprep.subr.bf16.mxu0 0
  %813 = vmatpush1.bf16.msra.mxu0 0
  %814 = vmatprep.subr.bf16.mxu0 0
  %815 = vmatpush1.bf16.msra.mxu0 0
  %816 = vmatprep.subr.bf16.mxu0 0
  %817 = vmatpush1.bf16.msra.mxu0 0
  %818 = vmatprep.subr.bf16.mxu0 0
  %819 = vmatpush1.bf16.msra.mxu0 0
  %820 = vmatprep.subr.bf16.mxu0 0
  %821 = vmatpush1.bf16.msra.mxu0 %v804
  %822 = vmatprep.subr.bf16.mxu0 0
  %823 = vmatpush2.bf16.msra.mxu0 0
  %824 = vmatprep.subr.bf16.mxu0 0
  %825 = vmatpush2.bf16.msra.mxu0 0
  %826 = vmatprep.subr.bf16.mxu0 0
  %827 = vmatpush2.bf16.msra.mxu0 0
  %828 = vmatprep.subr.bf16.mxu0 0
  %829 = vmatpush2.bf16.msra.mxu0 0
  %830 = vmatprep.subr.bf16.mxu0 0
  %831 = vmatpush2.bf16.msra.mxu0 0
  %832 = vmatprep.subr.bf16.mxu0 0
  %833 = vmatpush2.bf16.msra.mxu0 0
  %834 = vmatprep.subr.bf16.mxu0 0
  %835 = vmatpush2.bf16.msra.mxu0 0
  %836 = vmatprep.subr.bf16.mxu0 0
  %837 = vmatpush2.bf16.msra.mxu0 0
  %838 = vmatprep.mubr.bf16.mxu0 0
  %839 = vmatmul.mubr.bf16.gmra.mxu0 %v801
  %v840 = vpop.f32.mrf.mxu0
  %v841 = vadd.f32 0.0, %v840
  %v842 = vpop.f32.mrf.mxu0
  %v843 = vpop.f32.mrf.mxu0
  %v844 = vpop.f32.mrf.mxu0
  %845 = vdwg.mxu0
  %v847 = vrot.slane %v511, 4
  %v849 = vrot.slane %v512, 4
  %v851 = vsel %vm517, %v847, 0
  %v854 = vsel %vm517, %v849, 0
  %856 = vmatprep.subr.bf16.mxu0 0
  %857 = vmatpush1.bf16.xpose.msra.mxu0 0
  %858 = vmatprep.subr.bf16.mxu0 0
  %859 = vmatpush1.bf16.xpose.msra.mxu0 0
  %860 = vmatprep.subr.bf16.mxu0 0
  %861 = vmatpush1.bf16.xpose.msra.mxu0 0
  %862 = vmatprep.subr.bf16.mxu0 0
  %863 = vmatpush1.bf16.xpose.msra.mxu0 0
  %864 = vmatprep.subr.bf16.mxu0 0
  %865 = vmatpush1.bf16.xpose.msra.mxu0 0
  %866 = vmatprep.subr.bf16.mxu0 0
  %867 = vmatpush1.bf16.xpose.msra.mxu0 0
  %868 = vmatprep.subr.bf16.mxu0 0
  %869 = vmatpush1.bf16.xpose.msra.mxu0 0
  %870 = vmatprep.subr.bf16.mxu0 0
  %871 = vmatpush1.bf16.xpose.msra.mxu0 %v854
  %872 = vmatprep.subr.bf16.mxu0 0
  %873 = vmatpush2.bf16.xpose.msra.mxu0 0
  %874 = vmatprep.subr.bf16.mxu0 0
  %875 = vmatpush2.bf16.xpose.msra.mxu0 0
  %876 = vmatprep.subr.bf16.mxu0 0
  %877 = vmatpush2.bf16.xpose.msra.mxu0 0
  %878 = vmatprep.subr.bf16.mxu0 0
  %879 = vmatpush2.bf16.xpose.msra.mxu0 0
  %880 = vmatprep.subr.bf16.mxu0 0
  %881 = vmatpush2.bf16.xpose.msra.mxu0 0
  %882 = vmatprep.subr.bf16.mxu0 0
  %883 = vmatpush2.bf16.xpose.msra.mxu0 0
  %884 = vmatprep.subr.bf16.mxu0 0
  %885 = vmatpush2.bf16.xpose.msra.mxu0 0
  %886 = vmatprep.subr.bf16.mxu0 0
  %887 = vmatpush2.bf16.xpose.msra.mxu0 0
  %888 = vmatprep.mubr.bf16.mxu0 0
  %889 = vmatmul.mubr.bf16.gmra.mxu0 %v851
  %v890 = vpop.f32.mrf.mxu0
  %v891 = vadd.f32 0.0, %v890
  %v892 = vpop.f32.mrf.mxu0
  %v893 = vpop.f32.mrf.mxu0
  %v894 = vpop.f32.mrf.mxu0
  %895 = vdwg.mxu0
  %v896 = vsel %vm516, %v891, -1e+30
  %v897 = vsel %vm565, %v896, -inf
  %898 = vmax.xlane.f32.xlu0 %v897
  %v899 = vpop.xlane.xlu0 %898
  %v900 = vsub.f32 %v896, %v899
  %v901 = vmul.f32 %v900, 1.442695
  %v902 = vpow.pop %v901
  %v903 = vsel %vm565, %v902, 0.0
  %904 = vadd.xlane.f32.xlu0 %v903
  %v905 = vpop.xlane.xlu0 %904
  %v906 = vrcp.pop %v905
  %v907 = vmul.f32 %v902, %v906
  %v908 = vpack.c.bf16 %v907, %v907
  %v910 = vrot.slane %v513, 4
  %v912 = vsel %vm565, %v908, 0
  %v915 = vsel %vm581, %v910, 0
  %917 = vmatprep.subr.bf16.mxu0 0
  %918 = vmatpush1.bf16.msra.mxu0 0
  %919 = vmatprep.subr.bf16.mxu0 0
  %920 = vmatpush1.bf16.msra.mxu0 0
  %921 = vmatprep.subr.bf16.mxu0 0
  %922 = vmatpush1.bf16.msra.mxu0 0
  %923 = vmatprep.subr.bf16.mxu0 0
  %924 = vmatpush1.bf16.msra.mxu0 0
  %925 = vmatprep.subr.bf16.mxu0 0
  %926 = vmatpush1.bf16.msra.mxu0 0
  %927 = vmatprep.subr.bf16.mxu0 0
  %928 = vmatpush1.bf16.msra.mxu0 0
  %929 = vmatprep.subr.bf16.mxu0 0
  %930 = vmatpush1.bf16.msra.mxu0 0
  %931 = vmatprep.subr.bf16.mxu0 0
  %932 = vmatpush1.bf16.msra.mxu0 %v915
  %933 = vmatprep.subr.bf16.mxu0 0
  %934 = vmatpush2.bf16.msra.mxu0 0
  %935 = vmatprep.subr.bf16.mxu0 0
  %936 = vmatpush2.bf16.msra.mxu0 0
  %937 = vmatprep.subr.bf16.mxu0 0
  %938 = vmatpush2.bf16.msra.mxu0 0
  %939 = vmatprep.subr.bf16.mxu0 0
  %940 = vmatpush2.bf16.msra.mxu0 0
  %941 = vmatprep.subr.bf16.mxu0 0
  %942 = vmatpush2.bf16.msra.mxu0 0
  %943 = vmatprep.subr.bf16.mxu0 0
  %944 = vmatpush2.bf16.msra.mxu0 0
  %945 = vmatprep.subr.bf16.mxu0 0
  %946 = vmatpush2.bf16.msra.mxu0 0
  %947 = vmatprep.subr.bf16.mxu0 0
  %948 = vmatpush2.bf16.msra.mxu0 0
  %949 = vmatprep.mubr.bf16.mxu0 0
  %950 = vmatmul.mubr.bf16.gmra.mxu0 %v912
  %v951 = vpop.f32.mrf.mxu0
  %v952 = vadd.f32 0.0, %v951
  %v953 = vpop.f32.mrf.mxu0
  %v954 = vpop.f32.mrf.mxu0
  %v955 = vpop.f32.mrf.mxu0
  %956 = vdwg.mxu0
  %958 = vrot.lane.b32.xlu0 %v952, 16
  %v959 = vpop.permute.xlu0 %958
  %v961 = vsel %vm517, %v841, %v959
  %v962 = vld [vmem:[%s3] sm:$0xf]
  %v963 = vld [vmem:[%s3 + $0x4] sm:$0xf]
  %v964 = vld [vmem:[%s3 + $0x8] sm:$0xf]
  %v965 = vld [vmem:[%s3 + $0xc] sm:$0xf]
  %v966 = vpack.c.bf16 %v961, %v734
  %v971 = vunpack.c.l.b16 %v962
  %v972 = vunpack.c.l.b16 %v963
  %v973 = vunpack.c.l.b16 %v964
  %v974 = vunpack.c.l.b16 %v965
  %v975 = vpack.c.b16 %v972, %v971
  %v976 = vpack.c.b16 %v974, %v973
  %v980 = vsel %vm232, %v966, 0
  %982 = vmatprep.subr.bf16.mxu0 0
  %983 = vmatpush1.bf16.msra.mxu0 0
  %984 = vmatprep.subr.bf16.mxu0 0
  %985 = vmatpush1.bf16.msra.mxu0 0
  %986 = vmatprep.subr.bf16.mxu0 0
  %987 = vmatpush1.bf16.msra.mxu0 0
  %988 = vmatprep.subr.bf16.mxu0 0
  %989 = vmatpush1.bf16.msra.mxu0 0
  %990 = vmatprep.subr.bf16.mxu0 0
  %991 = vmatpush1.bf16.msra.mxu0 0
  %992 = vmatprep.subr.bf16.mxu0 0
  %993 = vmatpush1.bf16.msra.mxu0 0
  %994 = vmatprep.subr.bf16.mxu0 0
  %995 = vmatpush1.bf16.msra.mxu0 %v976
  %996 = vmatprep.subr.bf16.mxu0 0
  %997 = vmatpush1.bf16.msra.mxu0 %v975
  %998 = vmatprep.subr.bf16.mxu0 0
  %999 = vmatpush2.bf16.msra.mxu0 0
  %1000 = vmatprep.subr.bf16.mxu0 0
  %1001 = vmatpush2.bf16.msra.mxu0 0
  %1002 = vmatprep.subr.bf16.mxu0 0
  %1003 = vmatpush2.bf16.msra.mxu0 0
  %1004 = vmatprep.subr.bf16.mxu0 0
  %1005 = vmatpush2.bf16.msra.mxu0 0
  %1006 = vmatprep.subr.bf16.mxu0 0
  %1007 = vmatpush2.bf16.msra.mxu0 0
  %1008 = vmatprep.subr.bf16.mxu0 0
  %1009 = vmatpush2.bf16.msra.mxu0 0
  %1010 = vmatprep.subr.bf16.mxu0 0
  %1011 = vmatpush2.bf16.msra.mxu0 0
  %1012 = vmatprep.subr.bf16.mxu0 0
  %1013 = vmatpush2.bf16.msra.mxu0 0
  %1014 = vmatprep.mubr.bf16.mxu0 0
  %1015 = vmatmul.mubr.bf16.gmra.mxu0 %v980
  %v1016 = vpop.f32.mrf.mxu0
  %v1017 = vadd.f32 0.0, %v1016
  %v1018 = vpop.f32.mrf.mxu0
  %v1019 = vpop.f32.mrf.mxu0
  %v1020 = vadd.f32 0.0, %v1019
  %v1021 = vpop.f32.mrf.mxu0
  %1022 = vdwg.mxu0
  %v1023 = vadd.f32 %v226, %v1017
  %v1024 = vadd.f32 %v229, %v1020
  %v1025 = vlaneseq
  %v1026 = vshrl.u32 %v1025, 7
  %v1027 = vsub.s32 0, %v1026
  %v1028 = vrot.slane %v38, %v1027
  %v1029 = vadd.f32 %v1023, %v1028
  %v1030 = vadd.f32 %v1024, %v1028
  %v1031 = vsel %vm232, %v1029, 0.0
  %1032 = vadd.xlane.f32.xlu0 %v1031
  %v1033 = vpop.xlane.xlu0 %1032
  %v1034 = vsel %vm232, %v1030, 0.0
  %1035 = vadd.xlane.f32.xlu0 %v1034
  %v1036 = vpop.xlane.xlu0 %1035
  %v1037 = vmul.f32 %v1033, %v239
  %v1038 = vmul.f32 %v1036, %v239
  %v1039 = vsub.f32 %v1029, %v1037
  %v1040 = vsub.f32 %v1030, %v1038
  %v1041 = vmul.f32 %v1039, %v1039
  %v1042 = vmul.f32 %v1040, %v1040
  %v1043 = vsel %vm232, %v1041, 0.0
  %1044 = vadd.xlane.f32.xlu0 %v1043
  %v1045 = vpop.xlane.xlu0 %1044
  %v1046 = vsel %vm232, %v1042, 0.0
  %1047 = vadd.xlane.f32.xlu0 %v1046
  %v1048 = vpop.xlane.xlu0 %1047
  %v1049 = vmul.f32 %v1045, %v239
  %v1050 = vmul.f32 %v1048, %v239
  %v1051 = vadd.f32 %v1049, 1e-05
  %v1052 = vadd.f32 %v1050, 1e-05
  %v1053 = vrsqrt.pop %v1051
  %v1054 = vrsqrt.pop %v1052
  %v1055 = vmul.f32 %v1039, %v1053
  %v1056 = vmul.f32 %v1040, %v1054
  %v1057 = vlaneseq
  %v1058 = vshrl.u32 %v1057, 7
  %v1059 = vsub.s32 0, %v1058
  %v1060 = vrot.slane %v39, %v1059
  %v1061 = vmul.f32 %v1055, %v1060
  %v1062 = vmul.f32 %v1056, %v1060
  %v1063 = vlaneseq
  %v1064 = vshrl.u32 %v1063, 7
  %v1065 = vsub.s32 0, %v1064
  %v1066 = vrot.slane %v40, %v1065
  %v1067 = vadd.f32 %v1061, %v1066
  %v1068 = vadd.f32 %v1062, %v1066
  %v1069 = vld [vmem:[%s4] sm:$0xf]
  %v1070 = vld [vmem:[%s4 + $0x4] sm:$0xf]
  %v1071 = vld [vmem:[%s4 + $0x8] sm:$0xf]
  %v1072 = vld [vmem:[%s4 + $0xc] sm:$0xf]
  %v1073 = vpack.c.bf16 %v1068, %v1067
  %v1078 = vunpack.c.l.b16 %v1069
  %v1079 = vunpack.c.l.b16 %v1070
  %v1080 = vunpack.c.l.b16 %v1071
  %v1081 = vunpack.c.l.b16 %v1072
  %v1082 = vpack.c.b16 %v1079, %v1078
  %v1083 = vpack.c.b16 %v1081, %v1080
  %v1087 = vsel %vm232, %v1073, 0
  %1089 = vmatprep.subr.bf16.mxu0 0
  %1090 = vmatpush1.bf16.msra.mxu0 0
  %1091 = vmatprep.subr.bf16.mxu0 0
  %1092 = vmatpush1.bf16.msra.mxu0 0
  %1093 = vmatprep.subr.bf16.mxu0 0
  %1094 = vmatpush1.bf16.msra.mxu0 0
  %1095 = vmatprep.subr.bf16.mxu0 0
  %1096 = vmatpush1.bf16.msra.mxu0 0
  %1097 = vmatprep.subr.bf16.mxu0 0
  %1098 = vmatpush1.bf16.msra.mxu0 0
  %1099 = vmatprep.subr.bf16.mxu0 0
  %1100 = vmatpush1.bf16.msra.mxu0 0
  %1101 = vmatprep.subr.bf16.mxu0 0
  %1102 = vmatpush1.bf16.msra.mxu0 %v1083
  %1103 = vmatprep.subr.bf16.mxu0 0
  %1104 = vmatpush1.bf16.msra.mxu0 %v1082
  %1105 = vmatprep.subr.bf16.mxu0 0
  %1106 = vmatpush2.bf16.msra.mxu0 0
  %1107 = vmatprep.subr.bf16.mxu0 0
  %1108 = vmatpush2.bf16.msra.mxu0 0
  %1109 = vmatprep.subr.bf16.mxu0 0
  %1110 = vmatpush2.bf16.msra.mxu0 0
  %1111 = vmatprep.subr.bf16.mxu0 0
  %1112 = vmatpush2.bf16.msra.mxu0 0
  %1113 = vmatprep.subr.bf16.mxu0 0
  %1114 = vmatpush2.bf16.msra.mxu0 0
  %1115 = vmatprep.subr.bf16.mxu0 0
  %1116 = vmatpush2.bf16.msra.mxu0 0
  %1117 = vmatprep.subr.bf16.mxu0 0
  %1118 = vmatpush2.bf16.msra.mxu0 0
  %1119 = vmatprep.subr.bf16.mxu0 0
  %1120 = vmatpush2.bf16.msra.mxu0 0
  %1121 = vmatprep.mubr.bf16.mxu0 0
  %1122 = vmatmul.mubr.bf16.gmra.mxu0 %v1087
  %v1123 = vpop.f32.mrf.mxu0
  %v1124 = vadd.f32 %v47, %v1123
  %v1125 = vpop.f32.mrf.mxu0
  %v1126 = vpop.f32.mrf.mxu0
  %v1127 = vadd.f32 %v47, %v1126
  %v1128 = vpop.f32.mrf.mxu0
  %1129 = vdwg.mxu0
  %v1130 = vmul.f32 %v1124, %v1124
  %v1131 = vmul.f32 %v1127, %v1127
  %v1132 = vmul.f32 %v1124, %v1130
  %v1133 = vmul.f32 %v1127, %v1131
  %v1134 = vmul.f32 %v1132, 0.044715
  %v1135 = vmul.f32 %v1133, 0.044715
  %v1136 = vadd.f32 %v1124, %v1134
  %v1137 = vadd.f32 %v1127, %v1135
  %v1138 = vmul.f32 %v1136, 0.7978846
  %v1139 = vmul.f32 %v1137, 0.7978846
  %v1140 = vtanh.pop %v1138
  %v1141 = vtanh.pop %v1139
  %v1142 = vadd.f32 %v1140, 1.0
  %v1143 = vadd.f32 %v1141, 1.0
  %v1144 = vmul.f32 %v1142, 0.5
  %v1145 = vmul.f32 %v1143, 0.5
  %v1146 = vmul.f32 %v1124, %v1144
  %v1147 = vmul.f32 %v1127, %v1145
  %v1148 = vld [vmem:[%s5] sm:$0xf]
  %v1149 = vld [vmem:[%s5 + $0x4] sm:$0xf]
  %v1150 = vld [vmem:[%s5 + $0x8] sm:$0xf]
  %v1151 = vld [vmem:[%s5 + $0xc] sm:$0xf]
  %v1152 = vld [vmem:[%s5 + $0x10] sm:$0xf]
  %v1153 = vld [vmem:[%s5 + $0x14] sm:$0xf]
  %v1154 = vld [vmem:[%s5 + $0x18] sm:$0xf]
  %v1155 = vld [vmem:[%s5 + $0x1c] sm:$0xf]
  %v1156 = vpack.c.bf16 %v1147, %v1146
  %v1165 = vunpack.c.l.b16 %v1148
  %v1166 = vunpack.c.l.b16 %v1149
  %v1167 = vunpack.c.l.b16 %v1150
  %v1168 = vunpack.c.l.b16 %v1151
  %v1169 = vunpack.c.l.b16 %v1152
  %v1170 = vunpack.c.l.b16 %v1153
  %v1171 = vunpack.c.l.b16 %v1154
  %v1172 = vunpack.c.l.b16 %v1155
  %v1173 = vpack.c.b16 %v1166, %v1165
  %v1174 = vpack.c.b16 %v1168, %v1167
  %v1175 = vpack.c.b16 %v1170, %v1169
  %v1176 = vpack.c.b16 %v1172, %v1171
  %vm1181 = vcmask 523264
  %v1183 = vsel %vm1181, %v1156, 0
  %1185 = vmatprep.subr.bf16.mxu0 0
  %1186 = vmatpush1.bf16.msra.mxu0 0
  %1187 = vmatprep.subr.bf16.mxu0 0
  %1188 = vmatpush1.bf16.msra.mxu0 0
  %1189 = vmatprep.subr.bf16.mxu0 0
  %1190 = vmatpush1.bf16.msra.mxu0 0
  %1191 = vmatprep.subr.bf16.mxu0 0
  %1192 = vmatpush1.bf16.msra.mxu0 0
  %1193 = vmatprep.subr.bf16.mxu0 0
  %1194 = vmatpush1.bf16.msra.mxu0 %v1176
  %1195 = vmatprep.subr.bf16.mxu0 0
  %1196 = vmatpush1.bf16.msra.mxu0 %v1175
  %1197 = vmatprep.subr.bf16.mxu0 0
  %1198 = vmatpush1.bf16.msra.mxu0 %v1174
  %1199 = vmatprep.subr.bf16.mxu0 0
  %1200 = vmatpush1.bf16.msra.mxu0 %v1173
  %1201 = vmatprep.subr.bf16.mxu0 0
  %1202 = vmatpush2.bf16.msra.mxu0 0
  %1203 = vmatprep.subr.bf16.mxu0 0
  %1204 = vmatpush2.bf16.msra.mxu0 0
  %1205 = vmatprep.subr.bf16.mxu0 0
  %1206 = vmatpush2.bf16.msra.mxu0 0
  %1207 = vmatprep.subr.bf16.mxu0 0
  %1208 = vmatpush2.bf16.msra.mxu0 0
  %1209 = vmatprep.subr.bf16.mxu0 0
  %1210 = vmatpush2.bf16.msra.mxu0 0
  %1211 = vmatprep.subr.bf16.mxu0 0
  %1212 = vmatpush2.bf16.msra.mxu0 0
  %1213 = vmatprep.subr.bf16.mxu0 0
  %1214 = vmatpush2.bf16.msra.mxu0 0
  %1215 = vmatprep.subr.bf16.mxu0 0
  %1216 = vmatpush2.bf16.msra.mxu0 0
  %1217 = vmatprep.mubr.bf16.mxu0 0
  %1218 = vmatmul.mubr.bf16.gmra.mxu0 %v1183
  %v1219 = vpop.f32.mrf.mxu0
  %v1220 = vadd.f32 0.0, %v1219
  %v1221 = vpop.f32.mrf.mxu0
  %v1222 = vpop.f32.mrf.mxu0
  %v1223 = vadd.f32 0.0, %v1222
  %v1224 = vpop.f32.mrf.mxu0
  %1225 = vdwg.mxu0
  %v1226 = vadd.f32 %v1029, %v1220
  %v1227 = vadd.f32 %v1030, %v1223
  %v1228 = vlaneseq
  %v1229 = vshrl.u32 %v1228, 7
  %v1230 = vsub.s32 0, %v1229
  %v1231 = vrot.slane %v41, %v1230
  %v1232 = vadd.f32 %v1226, %v1231
  %v1233 = vadd.f32 %v1227, %v1231
  %v1235 = vrot.slane %v1233, 7
  %vm1237 = vcmask 1040384
  %v1238 = vsel %vm1237, %v1232, %v1235
  %vm1239 = vcmask 1041408
  %v1240 = vsel %vm1239, %v1238, 0.0
  %v1241 = vsel %vm232, %v1240, 0.0
  %1242 = vadd.xlane.f32.xlu0 %v1241
  %v1243 = vpop.xlane.xlu0 %1242
  %v1244 = vmul.f32 %v1243, %v239
  %v1245 = vsub.f32 %v1240, %v1244
  %v1246 = vmul.f32 %v1245, %v1245
  %v1247 = vsel %vm232, %v1246, 0.0
  %1248 = vadd.xlane.f32.xlu0 %v1247
  %v1249 = vpop.xlane.xlu0 %1248
  %v1250 = vmul.f32 %v1249, %v239
  %v1251 = vadd.f32 %v1250, 1e-05
  %v1252 = vrsqrt.pop %v1251
  %v1253 = vmul.f32 %v1245, %v1252
  %v1254 = vlaneseq
  %v1255 = vshrl.u32 %v1254, 7
  %v1256 = vsub.s32 0, %v1255
  %v1257 = vrot.slane %v42, %v1256
  %v1258 = vmul.f32 %v1253, %v1257
  %v1259 = vlaneseq
  %v1260 = vshrl.u32 %v1259, 7
  %v1261 = vsub.s32 0, %v1260
  %v1262 = vrot.slane %v43, %v1261
  %v1263 = vadd.f32 %v1258, %v1262
  %v1264 = vld [vmem:[%s6] sm:$0xf]
  %v1265 = vld [vmem:[%s6 + $0x4] sm:$0xf]
  %v1266 = vld [vmem:[%s6 + $0x8] sm:$0xf]
  %v1267 = vld [vmem:[%s6 + $0xc] sm:$0xf]
  %v1268 = vpack.c.bf16 %v1263, %v1263
  %v1273 = vunpack.c.l.b16 %v1264
  %v1274 = vunpack.c.l.b16 %v1265
  %v1275 = vunpack.c.l.b16 %v1266
  %v1276 = vunpack.c.l.b16 %v1267
  %v1277 = vpack.c.b16 %v1274, %v1273
  %v1278 = vpack.c.b16 %v1276, %v1275
  %v1282 = vsel %vm232, %v1268, 0
  %1284 = vmatprep.subr.bf16.mxu0 0
  %1285 = vmatpush1.bf16.msra.mxu0 0
  %1286 = vmatprep.subr.bf16.mxu0 0
  %1287 = vmatpush1.bf16.msra.mxu0 0
  %1288 = vmatprep.subr.bf16.mxu0 0
  %1289 = vmatpush1.bf16.msra.mxu0 0
  %1290 = vmatprep.subr.bf16.mxu0 0
  %1291 = vmatpush1.bf16.msra.mxu0 0
  %1292 = vmatprep.subr.bf16.mxu0 0
  %1293 = vmatpush1.bf16.msra.mxu0 0
  %1294 = vmatprep.subr.bf16.mxu0 0
  %1295 = vmatpush1.bf16.msra.mxu0 0
  %1296 = vmatprep.subr.bf16.mxu0 0
  %1297 = vmatpush1.bf16.msra.mxu0 %v1278
  %1298 = vmatprep.subr.bf16.mxu0 0
  %1299 = vmatpush1.bf16.msra.mxu0 %v1277
  %1300 = vmatprep.subr.bf16.mxu0 0
  %1301 = vmatpush2.bf16.msra.mxu0 0
  %1302 = vmatprep.subr.bf16.mxu0 0
  %1303 = vmatpush2.bf16.msra.mxu0 0
  %1304 = vmatprep.subr.bf16.mxu0 0
  %1305 = vmatpush2.bf16.msra.mxu0 0
  %1306 = vmatprep.subr.bf16.mxu0 0
  %1307 = vmatpush2.bf16.msra.mxu0 0
  %1308 = vmatprep.subr.bf16.mxu0 0
  %1309 = vmatpush2.bf16.msra.mxu0 0
  %1310 = vmatprep.subr.bf16.mxu0 0
  %1311 = vmatpush2.bf16.msra.mxu0 0
  %1312 = vmatprep.subr.bf16.mxu0 0
  %1313 = vmatpush2.bf16.msra.mxu0 0
  %1314 = vmatprep.subr.bf16.mxu0 0
  %1315 = vmatpush2.bf16.msra.mxu0 0
  %1316 = vmatprep.mubr.bf16.mxu0 0
  %1317 = vmatmul.mubr.bf16.gmra.mxu0 %v1282
  %v1318 = vpop.f32.mrf.mxu0
  %v1319 = vadd.f32 %v48, %v1318
  %v1320 = vpop.f32.mrf.mxu0
  %v1321 = vpop.f32.mrf.mxu0
  %v1322 = vpop.f32.mrf.mxu0
  %1323 = vdwg.mxu0
  %1324 = vst [vmem:[%s10] sm:$0xff] %v1319
  // Predicated region
  $region42: #{vit_forward.1} parent=0 // pred_check
    _
  $region43: #{vit_forward.1} parent=0 // pred_check_branch
    %1326 = sbr.rel (0) target = $region45
  $region44: #{vit_forward.1} parent=0 // pred_region
    _
  $region45: #{vit_forward.1} parent=0 // pred_fallthru
    _
  // Predicated region
  $region46: #{vit_forward.1} parent=0 // pred_check
    _
  $region47: #{vit_forward.1} parent=0 // pred_check_branch
    %1328 = sbr.rel (0) target = $region49
  $region48: #{vit_forward.1} parent=0 // pred_region
    _
  $region49: #{vit_forward.1} parent=0 // pred_fallthru
    _

</llo_original>
